<compile_context>
chip_gen: v5e
topology: v5e:2x2
jax: 0.10.0
libtpu: 0.0.40
codegen_flags: <defaults>
</compile_context>

<pallas_src>
import jax
import jax.numpy as jnp
from jax.experimental import pallas as pl
from jax.experimental.pallas import tpu as pltpu


# ----------------------------- Pallas kernel ------------------------------ #
def bilstm_kernel(maxlen_ref,          # (1,)          i32  SMEM (scalar prefetch)
                  x_ref,               # (1, T*tb, E)  f32  embedded rows (row = t*tb + i)
                  len_ref,             # (tb, 1)       i32  valid lengths for this tile
                  wx_ref,              # (E, 8D)       bf16 [W_ih_fwd | W_ih_bwd]
                  bx_ref,              # (1, 8D)       f32  [b_fwd | b_bwd] (b_ih + b_hh)
                  whhf_ref, whhb_ref,  # (D, 4D)       bf16 recurrent weights per dir
                  fcwf_ref, fcwb_ref,  # (1, D)        f32  fc halves
                  fcb_ref,             # (1, 1)        f32  fc bias
                  out_ref,             # (tb, 1)       f32  sigmoid(logit)
                  gxf, gxb,            # (T*tb, 4D)    f32  scratch: hoisted x-projections
                  hf, cf, hb, cb):     # (tb, D)       f32  scratch: LSTM state
    tb, D = hf.shape
    G = 4 * D

    # ---------- Prologue: ONE big input projection for both directions -----
    x_rows = x_ref[0]                                        # (T*tb, E)
    gx = jnp.dot(x_rows.astype(jnp.bfloat16), wx_ref[...],
                 preferred_element_type=jnp.float32) + bx_ref[...]
    gxf[...] = gx[:, :G]                                     # lane-aligned split
    gxb[...] = gx[:, G:]

    # Loop-invariant operands, read once (no per-iteration broadcasts/loads).
    whhf = whhf_ref[...]
    whhb = whhb_ref[...]
    lens = len_ref[...]                                      # (tb, 1) i32
    max_len = maxlen_ref[0]

    hf[...] = jnp.zeros_like(hf)
    cf[...] = jnp.zeros_like(cf)
    hb[...] = jnp.zeros_like(hb)
    cb[...] = jnp.zeros_like(cb)

    def lstm_step(gx_t, h_ref, c_ref, whh, mask):
        # gate pre-activations = hoisted x-projection + recurrent dot
        g = gx_t + jnp.dot(h_ref[...].astype(jnp.bfloat16), whh,
                           preferred_element_type=jnp.float32)
        # PyTorch gate order i, f, g, o; D % 128 == 0 keeps slices lane-aligned.
        i_g = jax.nn.sigmoid(g[:, 0:D])
        f_g = jax.nn.sigmoid(g[:, D:2 * D])
        g_g = jnp.tanh(g[:, 2 * D:3 * D])
        o_g = jax.nn.sigmoid(g[:, 3 * D:4 * D])
        c_new = f_g * c_ref[...] + i_g * g_g
        h_new = o_g * jnp.tanh(c_new)
        # Packed-sequence semantics: only update state on valid timesteps.
        h_ref[...] = jnp.where(mask, h_new, h_ref[...])
        c_ref[...] = jnp.where(mask, c_new, c_ref[...])

    # Time loop bounded by max(text_len); fwd + bwd handled in one body.
    @pl.loop(0, max_len)
    def _(t):
        rf = pl.multiple_of(t * tb, tb)
        lstm_step(gxf[pl.ds(rf, tb), :], hf, cf, whhf, t < lens)
        tr = max_len - 1 - t
        rb = pl.multiple_of(tr * tb, tb)
        lstm_step(gxb[pl.ds(rb, tb), :], hb, cb, whhb, tr < lens)

    # ------------- Epilogue: Linear(2D, 1) + sigmoid as VPU reduce ----------
    logit = (jnp.sum(hf[...] * fcwf_ref[...], axis=1, keepdims=True)
             + jnp.sum(hb[...] * fcwb_ref[...], axis=1, keepdims=True)
             + fcb_ref[...])                                 # (tb, 1)
    out_ref[...] = jax.nn.sigmoid(logit)


# ------------------------------- Wrapper ----------------------------------- #
def bilstm_forward(tokens, lengths, params, *, dimension, batch_tile=8):
    """tokens: (B, T) int32, lengths: (B,) int32 -> (B,) f32 probabilities."""
    B, T = tokens.shape
    D = dimension
    E = params["emb"].shape[1]
    tb = batch_tile
    assert tb % 8 == 0, "batch tile must be a multiple of the f32 sublane (8)"
    nb = pl.cdiv(B, tb)
    pB = nb * tb

    # ---- glue (plain JAX): embedding gather, batch padding, tile layout ----
    x = jnp.take(params["emb"], tokens, axis=0).astype(jnp.float32)   # (B, T, E)
    x = jnp.pad(x, ((0, pB - B), (0, 0), (0, 0)))                     # (pB, T, E)
    # Within a batch tile, rows are ordered (t, i) -> row t*tb + i.
    x = x.reshape(nb, tb, T, E).transpose(0, 2, 1, 3).reshape(nb, T * tb, E)

    lens = jnp.pad(lengths.astype(jnp.int32), ((0, pB - B),))[:, None]  # (pB, 1)
    max_len = jnp.max(lengths.astype(jnp.int32)).reshape(1)             # (1,) prefetch

    # bf16 MXU operands; the two directions' input projections concatenated so
    # the prologue is one matmul; b_ih + b_hh folded into one bias row.
    wx = jnp.concatenate([params["wih_f_t"], params["wih_b_t"]],
                         axis=1).astype(jnp.bfloat16)                   # (E, 8D)
    bx = jnp.concatenate([params["b_f"], params["b_b"]], axis=1)        # (1, 8D) f32
    whhf = params["whh_f_t"].astype(jnp.bfloat16)                       # (D, 4D)
    whhb = params["whh_b_t"].astype(jnp.bfloat16)                       # (D, 4D)
    fcwf = params["fcw_f_t"].reshape(1, D).astype(jnp.float32)          # (1, D)
    fcwb = params["fcw_b_t"].reshape(1, D).astype(jnp.float32)          # (1, D)
    fcb = params["fcb"].astype(jnp.float32)                             # (1, 1)

    grid_spec = pltpu.PrefetchScalarGridSpec(
        num_scalar_prefetch=1,
        grid=(nb,),
        in_specs=[
            pl.BlockSpec((1, T * tb, E), lambda b, ml: (b, 0, 0)),      # x rows
            pl.BlockSpec((tb, 1), lambda b, ml: (b, 0)),                # lengths
            pl.BlockSpec((E, 8 * D), lambda b, ml: (0, 0)),             # W_ih both dirs
            pl.BlockSpec((1, 8 * D), lambda b, ml: (0, 0)),             # biases
            pl.BlockSpec((D, 4 * D), lambda b, ml: (0, 0)),             # W_hh fwd
            pl.BlockSpec((D, 4 * D), lambda b, ml: (0, 0)),             # W_hh bwd
            pl.BlockSpec((1, D), lambda b, ml: (0, 0)),                 # fc fwd half
            pl.BlockSpec((1, D), lambda b, ml: (0, 0)),                 # fc bwd half
            pl.BlockSpec((1, 1), lambda b, ml: (0, 0)),                 # fc bias
        ],
        out_specs=pl.BlockSpec((tb, 1), lambda b, ml: (b, 0)),
        scratch_shapes=[
            pltpu.VMEM((T * tb, 4 * D), jnp.float32),                   # fwd x-projection
            pltpu.VMEM((T * tb, 4 * D), jnp.float32),                   # bwd x-projection
            pltpu.VMEM((tb, D), jnp.float32),                           # h fwd
            pltpu.VMEM((tb, D), jnp.float32),                           # c fwd
            pltpu.VMEM((tb, D), jnp.float32),                           # h bwd
            pltpu.VMEM((tb, D), jnp.float32),                           # c bwd
        ],
    )

    flops = 2 * T * pB * E * 8 * D + 2 * T * pB * D * 8 * D + 4 * pB * D
    bytes_accessed = (4 * pB * T * E + 2 * E * 8 * D + 2 * 2 * D * 4 * D
                      + 4 * 8 * D + 4 * 2 * D + 8 * pB)

    out = pl.pallas_call(
        bilstm_kernel,
        out_shape=jax.ShapeDtypeStruct((pB, 1), jnp.float32),
        grid_spec=grid_spec,
        compiler_params=pltpu.CompilerParams(
            dimension_semantics=("parallel",),
            vmem_limit_bytes=32 * 1024 * 1024),
        cost_estimate=pl.CostEstimate(
            flops=flops,
            transcendentals=10 * T * pB * D,
            bytes_accessed=bytes_accessed),
    )(max_len, x, lens, wx, bx, whhf, whhb, fcwf, fcwb, fcb)

    return out[:B, 0]                                                   # (B,)


# -------------------------- Pure-JAX reference ----------------------------- #
def ref_forward(tokens, lengths, params, *, dimension):
    D = dimension
    x = jnp.take(params["emb"], tokens, axis=0).astype(jnp.float32)  # (B,T,E)
    B, T, _ = x.shape
    lens = lengths[:, None]

    def cell(xt, h, c, wih_t, whh_t, b):
        g = xt @ wih_t + h @ whh_t + b
        i_g = jax.nn.sigmoid(g[:, :D]); f_g = jax.nn.sigmoid(g[:, D:2 * D])
        g_g = jnp.tanh(g[:, 2 * D:3 * D]); o_g = jax.nn.sigmoid(g[:, 3 * D:])
        c2 = f_g * c + i_g * g_g
        return o_g * jnp.tanh(c2), c2

    hf = jnp.zeros((B, D)); cf = jnp.zeros((B, D))
    hb = jnp.zeros((B, D)); cb = jnp.zeros((B, D))
    for t in range(T):
        m = t < lens
        h2, c2 = cell(x[:, t], hf, cf, params["wih_f_t"], params["whh_f_t"],
                      params["b_f"])
        hf = jnp.where(m, h2, hf); cf = jnp.where(m, c2, cf)
        tr = T - 1 - t
        mb = tr < lens
        h2, c2 = cell(x[:, tr], hb, cb, params["wih_b_t"], params["whh_b_t"],
                      params["b_b"])
        hb = jnp.where(mb, h2, hb); cb = jnp.where(mb, c2, cb)

    logit = hf @ params["fcw_f_t"] + hb @ params["fcw_b_t"] + params["fcb"]
    return jax.nn.sigmoid(logit)[:, 0]


# --------------------------------- Main ------------------------------------ #
if __name__ == "__main__":
    VOCAB = 50       # stands in for len(text_field.vocab)
    EMBED = 25       # nn.Embedding(..., 25)
    D = 128          # hidden "dimension" — multiple of 128 for lane-aligned gates
    B, T = 12, 8     # B > batch_tile so the batch-tiled grid is exercised

    key = jax.random.PRNGKey(0)
    ks = jax.random.split(key, 12)

    def init(k, shape, scale=0.1):
        return (scale * jax.random.normal(k, shape)).astype(jnp.float32)

    params = {
        "emb":     init(ks[0], (VOCAB, EMBED)),
        # LSTM weights stored transposed: gates = x @ Wih^T + h @ Whh^T + b
        "wih_f_t": init(ks[1], (EMBED, 4 * D)),
        "whh_f_t": init(ks[2], (D, 4 * D)),
        "b_f":     init(ks[3], (1, 4 * D)),       # b_ih + b_hh combined
        "wih_b_t": init(ks[4], (EMBED, 4 * D)),
        "whh_b_t": init(ks[5], (D, 4 * D)),
        "b_b":     init(ks[6], (1, 4 * D)),
        # fc = Linear(2D, 1); weight split into halves acting on [h_fwd, h_bwd]
        "fcw_f_t": init(ks[7], (D, 1)),
        "fcw_b_t": init(ks[8], (D, 1)),
        "fcb":     init(ks[9], (1, 1)),
    }

    tokens = jax.random.randint(ks[10], (B, T), 0, VOCAB, dtype=jnp.int32)
    text_len = jnp.array([8, 5, 8, 3, 1, 7, 6, 8, 2, 4, 8, 5], dtype=jnp.int32)

    out = bilstm_forward(tokens, text_len, params, dimension=D, batch_tile=8)
    out = jax.block_until_ready(out)

    ref = ref_forward(tokens, text_len, params, dimension=D)
    assert out.shape == (B,)
    # bf16 MXU operands (f32 accumulation) vs. pure-f32 reference.
    assert jnp.allclose(out, ref, rtol=5e-3, atol=5e-3), (out, ref)

    print("KERNEL_OK")
</pallas_src>

<mosaic_0001>
module attributes {stable_mosaic.version = 11 : i64} {
  func.func @bilstm_kernel(%arg0: i32, %arg1: memref<1xi32, #tpu.memory_space<smem>>, %arg2: memref<1x64x25xf32, #tpu.memory_space<vmem>>, %arg3: memref<8x1xi32, #tpu.memory_space<vmem>>, %arg4: memref<25x1024xbf16, #tpu.memory_space<vmem>>, %arg5: memref<1x1024xf32, #tpu.memory_space<vmem>>, %arg6: memref<128x512xbf16, #tpu.memory_space<vmem>>, %arg7: memref<128x512xbf16, #tpu.memory_space<vmem>>, %arg8: memref<1x128xf32, #tpu.memory_space<vmem>>, %arg9: memref<1x128xf32, #tpu.memory_space<vmem>>, %arg10: memref<1x1xf32, #tpu.memory_space<vmem>>, %arg11: memref<8x1xf32, #tpu.memory_space<vmem>>, %arg12: memref<64x512xf32, #tpu.memory_space<vmem>>, %arg13: memref<64x512xf32, #tpu.memory_space<vmem>>, %arg14: memref<8x128xf32, #tpu.memory_space<vmem>>, %arg15: memref<8x128xf32, #tpu.memory_space<vmem>>, %arg16: memref<8x128xf32, #tpu.memory_space<vmem>>, %arg17: memref<8x128xf32, #tpu.memory_space<vmem>>) attributes {dimension_semantics = [#tpu.dimension_semantics<parallel>], iteration_bounds = array<i64: 2>, scalar_prefetch = 1 : i64, scratch_operands = 6 : i64, tpu.core_type = #tpu.core_type<tc>, window_params = [{transform_indices = @transform_0, window_bounds = array<i64: 1, 64, 25>}, {transform_indices = @transform_1, window_bounds = array<i64: 8, 1>}, {pipeline_mode = #tpu.pipeline_mode<synchronous>, transform_indices = @transform_2, window_bounds = array<i64: 25, 1024>}, {pipeline_mode = #tpu.pipeline_mode<synchronous>, transform_indices = @transform_3, window_bounds = array<i64: 1, 1024>}, {pipeline_mode = #tpu.pipeline_mode<synchronous>, transform_indices = @transform_4, window_bounds = array<i64: 128, 512>}, {pipeline_mode = #tpu.pipeline_mode<synchronous>, transform_indices = @transform_5, window_bounds = array<i64: 128, 512>}, {pipeline_mode = #tpu.pipeline_mode<synchronous>, transform_indices = @transform_6, window_bounds = array<i64: 1, 128>}, {pipeline_mode = #tpu.pipeline_mode<synchronous>, transform_indices = @transform_7, window_bounds = array<i64: 1, 128>}, {pipeline_mode = #tpu.pipeline_mode<synchronous>, transform_indices = @transform_8, window_bounds = array<i64: 1, 1>}, {transform_indices = @transform_9, window_bounds = array<i64: 8, 1>}]} {
    %c0 = arith.constant 0 : index
    %c0_0 = arith.constant 0 : index
    %c0_1 = arith.constant 0 : index
    %0 = vector.load %arg2[%c0, %c0_0, %c0_1] : memref<1x64x25xf32, #tpu.memory_space<vmem>>, vector<1x64x25xf32>
    %1 = vector.shape_cast %0 : vector<1x64x25xf32> to vector<64x25xf32>
    %2 = arith.truncf %1 : vector<64x25xf32> to vector<64x25xbf16>
    %c0_2 = arith.constant 0 : index
    %c0_3 = arith.constant 0 : index
    %3 = vector.load %arg4[%c0_2, %c0_3] : memref<25x1024xbf16, #tpu.memory_space<vmem>>, vector<25x1024xbf16>
    %cst = arith.constant dense<0.000000e+00> : vector<64x1024xf32>
    %4 = tpu.matmul %2, %3, %cst {dimension_numbers = #tpu.dot_dimension_numbers<[1], [0], [0], [1], [0, 0, 1, 1], [], []>} : vector<64x25xbf16>, vector<25x1024xbf16>, vector<64x1024xf32> -> vector<64x1024xf32>
    %c0_4 = arith.constant 0 : index
    %c0_5 = arith.constant 0 : index
    %5 = vector.load %arg5[%c0_4, %c0_5] : memref<1x1024xf32, #tpu.memory_space<vmem>>, vector<1x1024xf32>
    %6 = vector.broadcast %5 : vector<1x1024xf32> to vector<64x1024xf32>
    %7 = arith.addf %4, %6 : vector<64x1024xf32>
    %8 = vector.extract_strided_slice %7 {offsets = [0, 0], sizes = [64, 512], strides = [1, 1]} : vector<64x1024xf32> to vector<64x512xf32>
    %c0_6 = arith.constant 0 : index
    %c0_7 = arith.constant 0 : index
    %9 = vector.load %arg12[%c0_6, %c0_7] : memref<64x512xf32, #tpu.memory_space<vmem>>, vector<64x512xf32>
    tpu.vector_store %arg12[%c0_6, %c0_7], %8 {strides = array<i32>} : memref<64x512xf32, #tpu.memory_space<vmem>>, vector<64x512xf32>,
    %10 = vector.extract_strided_slice %7 {offsets = [0, 512], sizes = [64, 512], strides = [1, 1]} : vector<64x1024xf32> to vector<64x512xf32>
    %c0_8 = arith.constant 0 : index
    %c0_9 = arith.constant 0 : index
    %11 = vector.load %arg13[%c0_8, %c0_9] : memref<64x512xf32, #tpu.memory_space<vmem>>, vector<64x512xf32>
    tpu.vector_store %arg13[%c0_8, %c0_9], %10 {strides = array<i32>} : memref<64x512xf32, #tpu.memory_space<vmem>>, vector<64x512xf32>,
    %c0_10 = arith.constant 0 : index
    %c0_11 = arith.constant 0 : index
    %12 = vector.load %arg6[%c0_10, %c0_11] : memref<128x512xbf16, #tpu.memory_space<vmem>>, vector<128x512xbf16>
    %c0_12 = arith.constant 0 : index
    %c0_13 = arith.constant 0 : index
    %13 = vector.load %arg7[%c0_12, %c0_13] : memref<128x512xbf16, #tpu.memory_space<vmem>>, vector<128x512xbf16>
    %c0_14 = arith.constant 0 : index
    %c0_15 = arith.constant 0 : index
    %14 = vector.load %arg3[%c0_14, %c0_15] : memref<8x1xi32, #tpu.memory_space<vmem>>, vector<8x1xi32>
    %c0_16 = arith.constant 0 : index
    %15 = memref.load %arg1[%c0_16] : memref<1xi32, #tpu.memory_space<smem>>
    %cst_17 = arith.constant 0.000000e+00 : f32
    %16 = vector.broadcast %cst_17 : f32 to vector<8x128xf32>
    %c0_18 = arith.constant 0 : index
    %c0_19 = arith.constant 0 : index
    %17 = vector.load %arg14[%c0_18, %c0_19] : memref<8x128xf32, #tpu.memory_space<vmem>>, vector<8x128xf32>
    tpu.vector_store %arg14[%c0_18, %c0_19], %16 {strides = array<i32>} : memref<8x128xf32, #tpu.memory_space<vmem>>, vector<8x128xf32>,
    %cst_20 = arith.constant 0.000000e+00 : f32
    %18 = vector.broadcast %cst_20 : f32 to vector<8x128xf32>
    %c0_21 = arith.constant 0 : index
    %c0_22 = arith.constant 0 : index
    %19 = vector.load %arg15[%c0_21, %c0_22] : memref<8x128xf32, #tpu.memory_space<vmem>>, vector<8x128xf32>
    tpu.vector_store %arg15[%c0_21, %c0_22], %18 {strides = array<i32>} : memref<8x128xf32, #tpu.memory_space<vmem>>, vector<8x128xf32>,
    %cst_23 = arith.constant 0.000000e+00 : f32
    %20 = vector.broadcast %cst_23 : f32 to vector<8x128xf32>
    %c0_24 = arith.constant 0 : index
    %c0_25 = arith.constant 0 : index
    %21 = vector.load %arg16[%c0_24, %c0_25] : memref<8x128xf32, #tpu.memory_space<vmem>>, vector<8x128xf32>
    tpu.vector_store %arg16[%c0_24, %c0_25], %20 {strides = array<i32>} : memref<8x128xf32, #tpu.memory_space<vmem>>, vector<8x128xf32>,
    %cst_26 = arith.constant 0.000000e+00 : f32
    %22 = vector.broadcast %cst_26 : f32 to vector<8x128xf32>
    %c0_27 = arith.constant 0 : index
    %c0_28 = arith.constant 0 : index
    %23 = vector.load %arg17[%c0_27, %c0_28] : memref<8x128xf32, #tpu.memory_space<vmem>>, vector<8x128xf32>
    tpu.vector_store %arg17[%c0_27, %c0_28], %22 {strides = array<i32>} : memref<8x128xf32, #tpu.memory_space<vmem>>, vector<8x128xf32>,
    %c0_i32 = arith.constant 0 : i32
    %24 = arith.subi %15, %c0_i32 : i32
    %c1_i32 = arith.constant 1 : i32
    %c1_i32_29 = arith.constant 1 : i32
    %25 = arith.subi %c1_i32, %c1_i32_29 : i32
    %26 = arith.addi %24, %25 : i32
    %c1_i32_30 = arith.constant 1 : i32
    %27 = arith.divsi %26, %c1_i32_30 : i32
    %c1_i32_31 = arith.constant 1 : i32
    %c0_i32_32 = arith.constant 0 : i32
    %c0_i32_33 = arith.constant 0 : i32
    %28 = arith.subi %27, %c0_i32_33 : i32
    %29 = arith.addi %c0_i32_33, %28 : i32
    %c1_i32_34 = arith.constant 1 : i32
    scf.for %arg18 = %c0_i32_33 to %29 step %c1_i32_34  : i32 {
      %52 = arith.muli %arg18, %c1_i32_31 : i32
      %53 = arith.addi %c0_i32_32, %52 : i32
      %c8_i32 = arith.constant 8 : i32
      %54 = arith.muli %53, %c8_i32 : i32
      %55 = tpu.assume_multiple %54, 8 : i32
      %56 = arith.index_cast %55 : i32 to index
      %c0_50 = arith.constant 0 : index
      %57 = vector.load %arg12[%56, %c0_50] : memref<64x512xf32, #tpu.memory_space<vmem>>, vector<8x512xf32>
      %58 = vector.broadcast %53 : i32 to vector<8x1xi32>
      %59 = arith.cmpi slt, %58, %14 : vector<8x1xi32>
      %c0_51 = arith.constant 0 : index
      %c0_52 = arith.constant 0 : index
      %60 = vector.load %arg14[%c0_51, %c0_52] : memref<8x128xf32, #tpu.memory_space<vmem>>, vector<8x128xf32>
      %61 = arith.truncf %60 : vector<8x128xf32> to vector<8x128xbf16>
      %cst_53 = arith.constant dense<0.000000e+00> : vector<8x512xf32>
      %62 = tpu.matmul %61, %12, %cst_53 {dimension_numbers = #tpu.dot_dimension_numbers<[1], [0], [0], [1], [0, 0, 1, 1], [], []>} : vector<8x128xbf16>, vector<128x512xbf16>, vector<8x512xf32> -> vector<8x512xf32>
      %63 = arith.addf %57, %62 : vector<8x512xf32>
      %64 = vector.extract_strided_slice %63 {offsets = [0, 0], sizes = [8, 128], strides = [1, 1]} : vector<8x512xf32> to vector<8x128xf32>
      %65 = arith.negf %64 : vector<8x128xf32>
      %66 = math.exp %65 : vector<8x128xf32>
      %cst_54 = arith.constant 1.000000e+00 : f32
      %67 = vector.broadcast %cst_54 : f32 to vector<8x128xf32>
      %68 = arith.addf %67, %66 : vector<8x128xf32>
      %69 = arith.divf %67, %68 : vector<8x128xf32>
      %70 = vector.extract_strided_slice %63 {offsets = [0, 128], sizes = [8, 128], strides = [1, 1]} : vector<8x512xf32> to vector<8x128xf32>
      %71 = arith.negf %70 : vector<8x128xf32>
      %72 = math.exp %71 : vector<8x128xf32>
      %cst_55 = arith.constant 1.000000e+00 : f32
      %73 = vector.broadcast %cst_55 : f32 to vector<8x128xf32>
      %74 = arith.addf %73, %72 : vector<8x128xf32>
      %75 = arith.divf %73, %74 : vector<8x128xf32>
      %76 = vector.extract_strided_slice %63 {offsets = [0, 256], sizes = [8, 128], strides = [1, 1]} : vector<8x512xf32> to vector<8x128xf32>
      %77 = math.tanh %76 : vector<8x128xf32>
      %78 = vector.extract_strided_slice %63 {offsets = [0, 384], sizes = [8, 128], strides = [1, 1]} : vector<8x512xf32> to vector<8x128xf32>
      %79 = arith.negf %78 : vector<8x128xf32>
      %80 = math.exp %79 : vector<8x128xf32>
      %cst_56 = arith.constant 1.000000e+00 : f32
      %81 = vector.broadcast %cst_56 : f32 to vector<8x128xf32>
      %82 = arith.addf %81, %80 : vector<8x128xf32>
      %83 = arith.divf %81, %82 : vector<8x128xf32>
      %c0_57 = arith.constant 0 : index
      %c0_58 = arith.constant 0 : index
      %84 = vector.load %arg15[%c0_57, %c0_58] : memref<8x128xf32, #tpu.memory_space<vmem>>, vector<8x128xf32>
      %85 = arith.mulf %75, %84 : vector<8x128xf32>
      %86 = arith.mulf %69, %77 : vector<8x128xf32>
      %87 = arith.addf %85, %86 : vector<8x128xf32>
      %88 = math.tanh %87 : vector<8x128xf32>
      %89 = arith.mulf %83, %88 : vector<8x128xf32>
      %c0_59 = arith.constant 0 : index
      %c0_60 = arith.constant 0 : index
      %90 = vector.load %arg14[%c0_59, %c0_60] : memref<8x128xf32, #tpu.memory_space<vmem>>, vector<8x128xf32>
      %91 = vector.shape_cast %59 : vector<8x1xi1> to vector<8x1xi1>
      %92 = vector.broadcast %91 : vector<8x1xi1> to vector<8x128xi1>
      %93 = arith.select %92, %89, %90 : vector<8x128xi1>, vector<8x128xf32>
      %c0_61 = arith.constant 0 : index
      %c0_62 = arith.constant 0 : index
      %94 = vector.load %arg14[%c0_61, %c0_62] : memref<8x128xf32, #tpu.memory_space<vmem>>, vector<8x128xf32>
      tpu.vector_store %arg14[%c0_61, %c0_62], %93 {strides = array<i32>} : memref<8x128xf32, #tpu.memory_space<vmem>>, vector<8x128xf32>,
      %c0_63 = arith.constant 0 : index
      %c0_64 = arith.constant 0 : index
      %95 = vector.load %arg15[%c0_63, %c0_64] : memref<8x128xf32, #tpu.memory_space<vmem>>, vector<8x128xf32>
      %96 = vector.shape_cast %59 : vector<8x1xi1> to vector<8x1xi1>
      %97 = vector.broadcast %96 : vector<8x1xi1> to vector<8x128xi1>
      %98 = arith.select %97, %87, %95 : vector<8x128xi1>, vector<8x128xf32>
      %c0_65 = arith.constant 0 : index
      %c0_66 = arith.constant 0 : index
      %99 = vector.load %arg15[%c0_65, %c0_66] : memref<8x128xf32, #tpu.memory_space<vmem>>, vector<8x128xf32>
      tpu.vector_store %arg15[%c0_65, %c0_66], %98 {strides = array<i32>} : memref<8x128xf32, #tpu.memory_space<vmem>>, vector<8x128xf32>,
      %c1_i32_67 = arith.constant 1 : i32
      %100 = arith.subi %15, %c1_i32_67 : i32
      %101 = arith.subi %100, %53 : i32
      %c8_i32_68 = arith.constant 8 : i32
      %102 = arith.muli %101, %c8_i32_68 : i32
      %103 = tpu.assume_multiple %102, 8 : i32
      %104 = arith.index_cast %103 : i32 to index
      %c0_69 = arith.constant 0 : index
      %105 = vector.load %arg13[%104, %c0_69] : memref<64x512xf32, #tpu.memory_space<vmem>>, vector<8x512xf32>
      %106 = vector.broadcast %101 : i32 to vector<8x1xi32>
      %107 = arith.cmpi slt, %106, %14 : vector<8x1xi32>
      %c0_70 = arith.constant 0 : index
      %c0_71 = arith.constant 0 : index
      %108 = vector.load %arg16[%c0_70, %c0_71] : memref<8x128xf32, #tpu.memory_space<vmem>>, vector<8x128xf32>
      %109 = arith.truncf %108 : vector<8x128xf32> to vector<8x128xbf16>
      %cst_72 = arith.constant dense<0.000000e+00> : vector<8x512xf32>
      %110 = tpu.matmul %109, %13, %cst_72 {dimension_numbers = #tpu.dot_dimension_numbers<[1], [0], [0], [1], [0, 0, 1, 1], [], []>} : vector<8x128xbf16>, vector<128x512xbf16>, vector<8x512xf32> -> vector<8x512xf32>
      %111 = arith.addf %105, %110 : vector<8x512xf32>
      %112 = vector.extract_strided_slice %111 {offsets = [0, 0], sizes = [8, 128], strides = [1, 1]} : vector<8x512xf32> to vector<8x128xf32>
      %113 = arith.negf %112 : vector<8x128xf32>
      %114 = math.exp %113 : vector<8x128xf32>
      %cst_73 = arith.constant 1.000000e+00 : f32
      %115 = vector.broadcast %cst_73 : f32 to vector<8x128xf32>
      %116 = arith.addf %115, %114 : vector<8x128xf32>
      %117 = arith.divf %115, %116 : vector<8x128xf32>
      %118 = vector.extract_strided_slice %111 {offsets = [0, 128], sizes = [8, 128], strides = [1, 1]} : vector<8x512xf32> to vector<8x128xf32>
      %119 = arith.negf %118 : vector<8x128xf32>
      %120 = math.exp %119 : vector<8x128xf32>
      %cst_74 = arith.constant 1.000000e+00 : f32
      %121 = vector.broadcast %cst_74 : f32 to vector<8x128xf32>
      %122 = arith.addf %121, %120 : vector<8x128xf32>
      %123 = arith.divf %121, %122 : vector<8x128xf32>
      %124 = vector.extract_strided_slice %111 {offsets = [0, 256], sizes = [8, 128], strides = [1, 1]} : vector<8x512xf32> to vector<8x128xf32>
      %125 = math.tanh %124 : vector<8x128xf32>
      %126 = vector.extract_strided_slice %111 {offsets = [0, 384], sizes = [8, 128], strides = [1, 1]} : vector<8x512xf32> to vector<8x128xf32>
      %127 = arith.negf %126 : vector<8x128xf32>
      %128 = math.exp %127 : vector<8x128xf32>
      %cst_75 = arith.constant 1.000000e+00 : f32
      %129 = vector.broadcast %cst_75 : f32 to vector<8x128xf32>
      %130 = arith.addf %129, %128 : vector<8x128xf32>
      %131 = arith.divf %129, %130 : vector<8x128xf32>
      %c0_76 = arith.constant 0 : index
      %c0_77 = arith.constant 0 : index
      %132 = vector.load %arg17[%c0_76, %c0_77] : memref<8x128xf32, #tpu.memory_space<vmem>>, vector<8x128xf32>
      %133 = arith.mulf %123, %132 : vector<8x128xf32>
      %134 = arith.mulf %117, %125 : vector<8x128xf32>
      %135 = arith.addf %133, %134 : vector<8x128xf32>
      %136 = math.tanh %135 : vector<8x128xf32>
      %137 = arith.mulf %131, %136 : vector<8x128xf32>
      %c0_78 = arith.constant 0 : index
      %c0_79 = arith.constant 0 : index
      %138 = vector.load %arg16[%c0_78, %c0_79] : memref<8x128xf32, #tpu.memory_space<vmem>>, vector<8x128xf32>
      %139 = vector.shape_cast %107 : vector<8x1xi1> to vector<8x1xi1>
      %140 = vector.broadcast %139 : vector<8x1xi1> to vector<8x128xi1>
      %141 = arith.select %140, %137, %138 : vector<8x128xi1>, vector<8x128xf32>
      %c0_80 = arith.constant 0 : index
      %c0_81 = arith.constant 0 : index
      %142 = vector.load %arg16[%c0_80, %c0_81] : memref<8x128xf32, #tpu.memory_space<vmem>>, vector<8x128xf32>
      tpu.vector_store %arg16[%c0_80, %c0_81], %141 {strides = array<i32>} : memref<8x128xf32, #tpu.memory_space<vmem>>, vector<8x128xf32>,
      %c0_82 = arith.constant 0 : index
      %c0_83 = arith.constant 0 : index
      %143 = vector.load %arg17[%c0_82, %c0_83] : memref<8x128xf32, #tpu.memory_space<vmem>>, vector<8x128xf32>
      %144 = vector.shape_cast %107 : vector<8x1xi1> to vector<8x1xi1>
      %145 = vector.broadcast %144 : vector<8x1xi1> to vector<8x128xi1>
      %146 = arith.select %145, %135, %143 : vector<8x128xi1>, vector<8x128xf32>
      %c0_84 = arith.constant 0 : index
      %c0_85 = arith.constant 0 : index
      %147 = vector.load %arg17[%c0_84, %c0_85] : memref<8x128xf32, #tpu.memory_space<vmem>>, vector<8x128xf32>
      tpu.vector_store %arg17[%c0_84, %c0_85], %146 {strides = array<i32>} : memref<8x128xf32, #tpu.memory_space<vmem>>, vector<8x128xf32>,
    }
    %c0_35 = arith.constant 0 : index
    %c0_36 = arith.constant 0 : index
    %30 = vector.load %arg14[%c0_35, %c0_36] : memref<8x128xf32, #tpu.memory_space<vmem>>, vector<8x128xf32>
    %c0_37 = arith.constant 0 : index
    %c0_38 = arith.constant 0 : index
    %31 = vector.load %arg8[%c0_37, %c0_38] : memref<1x128xf32, #tpu.memory_space<vmem>>, vector<1x128xf32>
    %32 = vector.broadcast %31 : vector<1x128xf32> to vector<8x128xf32>
    %33 = arith.mulf %30, %32 : vector<8x128xf32>
    %cst_39 = arith.constant dense<0.000000e+00> : vector<8xf32>
    %34 = vector.multi_reduction <add>, %33, %cst_39 [1] : vector<8x128xf32> to vector<8xf32>
    %35 = vector.shape_cast %34 : vector<8xf32> to vector<8x1xf32>
    %c0_40 = arith.constant 0 : index
    %c0_41 = arith.constant 0 : index
    %36 = vector.load %arg16[%c0_40, %c0_41] : memref<8x128xf32, #tpu.memory_space<vmem>>, vector<8x128xf32>
    %c0_42 = arith.constant 0 : index
    %c0_43 = arith.constant 0 : index
    %37 = vector.load %arg9[%c0_42, %c0_43] : memref<1x128xf32, #tpu.memory_space<vmem>>, vector<1x128xf32>
    %38 = vector.broadcast %37 : vector<1x128xf32> to vector<8x128xf32>
    %39 = arith.mulf %36, %38 : vector<8x128xf32>
    %cst_44 = arith.constant dense<0.000000e+00> : vector<8xf32>
    %40 = vector.multi_reduction <add>, %39, %cst_44 [1] : vector<8x128xf32> to vector<8xf32>
    %41 = vector.shape_cast %40 : vector<8xf32> to vector<8x1xf32>
    %42 = arith.addf %35, %41 : vector<8x1xf32>
    %c0_45 = arith.constant 0 : index
    %c0_46 = arith.constant 0 : index
    %43 = vector.load %arg10[%c0_45, %c0_46] : memref<1x1xf32, #tpu.memory_space<vmem>>, vector<1x1xf32>
    %44 = vector.broadcast %43 : vector<1x1xf32> to vector<8x1xf32>
    %45 = arith.addf %42, %44 : vector<8x1xf32>
    %46 = arith.negf %45 : vector<8x1xf32>
    %47 = math.exp %46 : vector<8x1xf32>
    %cst_47 = arith.constant 1.000000e+00 : f32
    %48 = vector.broadcast %cst_47 : f32 to vector<8x1xf32>
    %49 = arith.addf %48, %47 : vector<8x1xf32>
    %50 = arith.divf %48, %49 : vector<8x1xf32>
    %c0_48 = arith.constant 0 : index
    %c0_49 = arith.constant 0 : index
    %51 = vector.load %arg11[%c0_48, %c0_49] : memref<8x1xf32, #tpu.memory_space<vmem>>, vector<8x1xf32>
    tpu.vector_store %arg11[%c0_48, %c0_49], %50 {strides = array<i32>} : memref<8x1xf32, #tpu.memory_space<vmem>>, vector<8x1xf32>,
    return
  }
  func.func @transform_0(%arg0: i32, %arg1: memref<1xi32, #tpu.memory_space<smem>>) -> (i32, i32, i32) {
    %c0_i32 = arith.constant 0 : i32
    %c0_i32_0 = arith.constant 0 : i32
    %c0_i32_1 = arith.constant 0 : i32
    return %arg0, %c0_i32, %c0_i32_0 : i32, i32, i32
  }
  func.func @transform_1(%arg0: i32, %arg1: memref<1xi32, #tpu.memory_space<smem>>) -> (i32, i32) {
    %c0_i32 = arith.constant 0 : i32
    %c0_i32_0 = arith.constant 0 : i32
    return %arg0, %c0_i32 : i32, i32
  }
  func.func @transform_2(%arg0: i32, %arg1: memref<1xi32, #tpu.memory_space<smem>>) -> (i32, i32) {
    %c0_i32 = arith.constant 0 : i32
    %c0_i32_0 = arith.constant 0 : i32
    %c0_i32_1 = arith.constant 0 : i32
    return %c0_i32, %c0_i32_0 : i32, i32
  }
  func.func @transform_3(%arg0: i32, %arg1: memref<1xi32, #tpu.memory_space<smem>>) -> (i32, i32) {
    %c0_i32 = arith.constant 0 : i32
    %c0_i32_0 = arith.constant 0 : i32
    %c0_i32_1 = arith.constant 0 : i32
    return %c0_i32, %c0_i32_0 : i32, i32
  }
  func.func @transform_4(%arg0: i32, %arg1: memref<1xi32, #tpu.memory_space<smem>>) -> (i32, i32) {
    %c0_i32 = arith.constant 0 : i32
    %c0_i32_0 = arith.constant 0 : i32
    %c0_i32_1 = arith.constant 0 : i32
    return %c0_i32, %c0_i32_0 : i32, i32
  }
  func.func @transform_5(%arg0: i32, %arg1: memref<1xi32, #tpu.memory_space<smem>>) -> (i32, i32) {
    %c0_i32 = arith.constant 0 : i32
    %c0_i32_0 = arith.constant 0 : i32
    %c0_i32_1 = arith.constant 0 : i32
    return %c0_i32, %c0_i32_0 : i32, i32
  }
  func.func @transform_6(%arg0: i32, %arg1: memref<1xi32, #tpu.memory_space<smem>>) -> (i32, i32) {
    %c0_i32 = arith.constant 0 : i32
    %c0_i32_0 = arith.constant 0 : i32
    %c0_i32_1 = arith.constant 0 : i32
    return %c0_i32, %c0_i32_0 : i32, i32
  }
  func.func @transform_7(%arg0: i32, %arg1: memref<1xi32, #tpu.memory_space<smem>>) -> (i32, i32) {
    %c0_i32 = arith.constant 0 : i32
    %c0_i32_0 = arith.constant 0 : i32
    %c0_i32_1 = arith.constant 0 : i32
    return %c0_i32, %c0_i32_0 : i32, i32
  }
  func.func @transform_8(%arg0: i32, %arg1: memref<1xi32, #tpu.memory_space<smem>>) -> (i32, i32) {
    %c0_i32 = arith.constant 0 : i32
    %c0_i32_0 = arith.constant 0 : i32
    %c0_i32_1 = arith.constant 0 : i32
    return %c0_i32, %c0_i32_0 : i32, i32
  }
  func.func @transform_9(%arg0: i32, %arg1: memref<1xi32, #tpu.memory_space<smem>>) -> (i32, i32) {
    %c0_i32 = arith.constant 0 : i32
    %c0_i32_0 = arith.constant 0 : i32
    return %arg0, %c0_i32 : i32, i32
  }
}

</mosaic_0001>

<llo_original>
// kernel: tpu_custom_call.1
$region0: #{tpu_custom_call.1}
  #allocation0 [shape = 'u32[]', space=smem, size = 0x4, offset = 0x4, fixed_abs, tag = 'smem constant byte address 0x4 - core index']
  #allocation1 [shape = 'u32[72,128]{1,0:T(1,128)}', space=vmem, size = 0x9000, scoped, tag = 'internal scratch']
  #allocation2 [shape = 'f32[64,512]{1,0:T(8,128)}', space=vmem, size = 0x20000, scoped, tag = 'scratch operand']
  #allocation3 [shape = 'f32[64,512]{1,0:T(8,128)}', space=vmem, size = 0x20000, scoped, tag = 'scratch operand']
  #allocation4 [shape = 'f32[8,128]{1,0:T(8,128)}', space=vmem, size = 0x1000, scoped, tag = 'scratch operand']
  #allocation5 [shape = 'f32[8,128]{1,0:T(8,128)}', space=vmem, size = 0x1000, scoped, tag = 'scratch operand']
  #allocation6 [shape = 'f32[8,128]{1,0:T(8,128)}', space=vmem, size = 0x1000, scoped, tag = 'scratch operand']
  #allocation7 [shape = 'f32[8,128]{1,0:T(8,128)}', space=vmem, size = 0x1000, scoped, tag = 'scratch operand']
  #allocation8 [shape = 's32[1]{0}', space=sflag, size = 0x4, scoped, tag = 'scoped memory for tpu_custom_call.1']
  #allocation9 [shape = 's32[1]{0:T(128)S(6)}', space=smem, size = 0x200, scoped, tag = 'prefetched SMEM operand 0']
  #allocation10 [shape = 'f32[1,1]{1,0:T(1,128)S(1)}', space=vmem, size = 0x200, scoped, tag = 'scoped memory for tpu_custom_call.1']
  %s0 = inlined_call_operand.<no memory space> [shape: s32[1], index: 0, kind: input, shape index: {}]
  %s1 = inlined_call_operand.vmem [shape: f32[2,64,25], index: 1, kind: input, shape index: {}]
  %s2 = inlined_call_operand.vmem [shape: s32[16,1], index: 2, kind: input, shape index: {}]
  %s3 = inlined_call_operand.vmem [shape: bf16[25,1024], index: 3, kind: input, shape index: {}]
  %s4 = inlined_call_operand.vmem [shape: f32[1,1024], index: 4, kind: input, shape index: {}]
  %s5 = inlined_call_operand.hbm [shape: bf16[128,512], index: 5, kind: input, shape index: {}]
  %s6 = inlined_call_operand.hbm [shape: bf16[128,512], index: 6, kind: input, shape index: {}]
  %s7 = inlined_call_operand.vmem [shape: f32[1,128], index: 7, kind: input, shape index: {}]
  %s8 = inlined_call_operand.vmem [shape: f32[1,128], index: 8, kind: input, shape index: {}]
  %s9 = inlined_call_operand.<no memory space> [shape: f32[1,1], index: 9, kind: input, shape index: {}]
  %s10 = inlined_call_operand.vmem [shape: f32[16,1], index: 10, kind: output, shape index: {}]
  %s11 = sld [smem:[#allocation0]]
  $region84: #{tpu_custom_call.1} parent=0
    _
  %s13 = ssub.s32 1, %s11
  %s14 = scalar_select 0, %s13, %s11
  %15 = sst [smem:[#allocation9]] %s0
  %v16 = vstv %s9
  %17 = vst [vmem:[#allocation10] sm:$0x1] %v16
  $region1: #{tpu_custom_call.1} parent=0
    #allocation11 [shape = 'u8[131072]{0}', space=vmem, size = 0x20000, scoped, tag = 'input window, operand 5, single buffered']
    #allocation12 [shape = 's32[2]{0}', space=sflag, size = 0x8, scoped, tag = 'scoped memory for tpu_custom_call.1']
    #allocation13 [shape = 'u8[131072]{0}', space=vmem, size = 0x20000, scoped, tag = 'input window, operand 6, single buffered']
    #allocation14 [shape = 's32[1]{0}', space=sflag, size = 0x4, scoped, tag = 'scoped memory for tpu_custom_call.1']
    %18 = vsyncpa [#allocation12], 0
    %19 = vsyncpa [#allocation14], 0
    loop: start=0, step=1, limit=4
    $region2: #{tpu_custom_call.1} parent=1 // loop_pre_header
      _
    $region3: #{tpu_custom_call.1} parent=1 // loop_header
      %s21 = sphi 0, %s25
      %p22 = scmp.ge.s32.totalorder %s21, 4
      %s31 = sphi 0, %s33
      %s34 = sphi 0, %s31
      %s35 = sphi 0, %s34
      %s51 = sphi 0, %s35
      %s57 = sphi 0, %s59
      %s60 = sphi 0, %s57
      %s61 = sphi 0, %s60
      %s77 = sphi 0, %s61
      %s81 = sphi 0, %s81
      %s83 = sphi 0, %s81
      %s84 = sphi 0, %s83
      %s98 = sphi 0, %s84
      %s102 = sphi 0, %s102
      %s104 = sphi 0, %s102
      %s105 = sphi 0, %s104
      %s119 = sphi 0, %s105
      %s123 = sphi 0, %s123
      %s125 = sphi 0, %s123
      %s126 = sphi 0, %s125
      %s140 = sphi 0, %s126
      %s144 = sphi 0, %s144
      %s146 = sphi 0, %s144
      %s147 = sphi 0, %s146
      %s161 = sphi 0, %s147
      %s165 = sphi 0, %s165
      %s167 = sphi 0, %s165
      %s168 = sphi 0, %s167
      %s182 = sphi 0, %s168
      %s186 = sphi 0, %s186
      %s188 = sphi 0, %s186
      %s189 = sphi 0, %s188
      %s203 = sphi 0, %s189
      %s207 = sphi 0, %s207
      %s209 = sphi 0, %s207
      %s210 = sphi 0, %s209
      %s224 = sphi 0, %s210
      %s230 = sphi 0, %s232
      %s233 = sphi 0, %s230
      %s234 = sphi 0, %s233
      %s250 = sphi 0, %s234
    $region4: #{tpu_custom_call.1} parent=1 // loop_header_branch
      %24 = sbr.rel (%p22) target = $region8
    $region5: #{tpu_custom_call.1} parent=1 // loop_body
      %s26 = ssub.s32 %s21, 1
      %s27 = ssub.s32 %s21, 2
      %s28 = sadd.s32 %s21, 1
      %s29 = ssub.s32 %s21, %s28
      %p30 = scmp.eq.s32.totalorder %s29, 0
      %s32 = sadd.s32 %s31, 1
      %s33 = scalar_select %p30, %s31, %s32
      %p36 = pneg %p30
      %p37 = scmp.eq.s32.totalorder %s21, 1
      %p38 = por %p36, %p37
      %p39 = scmp.ne.s32.totalorder %s31, %s34
      %p40 = scmp.eq.s32.totalorder %s21, 0
      %p41 = por %p39, %p40
      %p42 = scmp.ne.s32.totalorder %s31, %s34
      %p43 = scmp.eq.s32.totalorder %s26, 1
      %p44 = por %p42, %p43
      %p45 = scmp.ne.s32.totalorder %s34, %s35
      %p46 = scmp.eq.s32.totalorder %s26, 0
      %p47 = por %p45, %p46
      %p48 = scmp.ne.s32.totalorder %s34, %s35
      %p49 = scmp.eq.s32.totalorder %s27, 1
      %p50 = por %p48, %p49
      %p52 = scmp.ne.s32.totalorder %s35, %s51
      %p53 = scmp.eq.s32.totalorder %s27, 0
      %p54 = por %p52, %p53
      %s55 = ssub.s32 %s21, %s28
      %p56 = scmp.eq.s32.totalorder %s55, 0
      %s58 = sadd.s32 %s57, 1
      %s59 = scalar_select %p56, %s57, %s58
      %p62 = pneg %p56
      %p63 = scmp.eq.s32.totalorder %s21, 1
      %p64 = por %p62, %p63
      %p65 = scmp.ne.s32.totalorder %s57, %s60
      %p66 = scmp.eq.s32.totalorder %s21, 0
      %p67 = por %p65, %p66
      %p68 = scmp.ne.s32.totalorder %s57, %s60
      %p69 = scmp.eq.s32.totalorder %s26, 1
      %p70 = por %p68, %p69
      %p71 = scmp.ne.s32.totalorder %s60, %s61
      %p72 = scmp.eq.s32.totalorder %s26, 0
      %p73 = por %p71, %p72
      %p74 = scmp.ne.s32.totalorder %s60, %s61
      %p75 = scmp.eq.s32.totalorder %s27, 1
      %p76 = por %p74, %p75
      %p78 = scmp.ne.s32.totalorder %s61, %s77
      %p79 = scmp.eq.s32.totalorder %s27, 0
      %p80 = por %p78, %p79
      %s82 = sadd.s32 %s81, 1
      %p85 = scmp.eq.s32.totalorder %s21, 1
      %p86 = scmp.ne.s32.totalorder %s81, %s83
      %p87 = scmp.eq.s32.totalorder %s21, 0
      %p88 = por %p86, %p87
      %p89 = scmp.ne.s32.totalorder %s81, %s83
      %p90 = scmp.eq.s32.totalorder %s26, 1
      %p91 = por %p89, %p90
      %p92 = scmp.ne.s32.totalorder %s83, %s84
      %p93 = scmp.eq.s32.totalorder %s26, 0
      %p94 = por %p92, %p93
      %p95 = scmp.ne.s32.totalorder %s83, %s84
      %p96 = scmp.eq.s32.totalorder %s27, 1
      %p97 = por %p95, %p96
      %p99 = scmp.ne.s32.totalorder %s84, %s98
      %p100 = scmp.eq.s32.totalorder %s27, 0
      %p101 = por %p99, %p100
      %s103 = sadd.s32 %s102, 1
      %p106 = scmp.eq.s32.totalorder %s21, 1
      %p107 = scmp.ne.s32.totalorder %s102, %s104
      %p108 = scmp.eq.s32.totalorder %s21, 0
      %p109 = por %p107, %p108
      %p110 = scmp.ne.s32.totalorder %s102, %s104
      %p111 = scmp.eq.s32.totalorder %s26, 1
      %p112 = por %p110, %p111
      %p113 = scmp.ne.s32.totalorder %s104, %s105
      %p114 = scmp.eq.s32.totalorder %s26, 0
      %p115 = por %p113, %p114
      %p116 = scmp.ne.s32.totalorder %s104, %s105
      %p117 = scmp.eq.s32.totalorder %s27, 1
      %p118 = por %p116, %p117
      %p120 = scmp.ne.s32.totalorder %s105, %s119
      %p121 = scmp.eq.s32.totalorder %s27, 0
      %p122 = por %p120, %p121
      %s124 = sadd.s32 %s123, 1
      %p127 = scmp.eq.s32.totalorder %s21, 1
      %p128 = scmp.ne.s32.totalorder %s123, %s125
      %p129 = scmp.eq.s32.totalorder %s21, 0
      %p130 = por %p128, %p129
      %p131 = scmp.ne.s32.totalorder %s123, %s125
      %p132 = scmp.eq.s32.totalorder %s26, 1
      %p133 = por %p131, %p132
      %p134 = scmp.ne.s32.totalorder %s125, %s126
      %p135 = scmp.eq.s32.totalorder %s26, 0
      %p136 = por %p134, %p135
      %p137 = scmp.ne.s32.totalorder %s125, %s126
      %p138 = scmp.eq.s32.totalorder %s27, 1
      %p139 = por %p137, %p138
      %p141 = scmp.ne.s32.totalorder %s126, %s140
      %p142 = scmp.eq.s32.totalorder %s27, 0
      %p143 = por %p141, %p142
      %s145 = sadd.s32 %s144, 1
      %p148 = scmp.eq.s32.totalorder %s21, 1
      %p149 = scmp.ne.s32.totalorder %s144, %s146
      %p150 = scmp.eq.s32.totalorder %s21, 0
      %p151 = por %p149, %p150
      %p152 = scmp.ne.s32.totalorder %s144, %s146
      %p153 = scmp.eq.s32.totalorder %s26, 1
      %p154 = por %p152, %p153
      %p155 = scmp.ne.s32.totalorder %s146, %s147
      %p156 = scmp.eq.s32.totalorder %s26, 0
      %p157 = por %p155, %p156
      %p158 = scmp.ne.s32.totalorder %s146, %s147
      %p159 = scmp.eq.s32.totalorder %s27, 1
      %p160 = por %p158, %p159
      %p162 = scmp.ne.s32.totalorder %s147, %s161
      %p163 = scmp.eq.s32.totalorder %s27, 0
      %p164 = por %p162, %p163
      %s166 = sadd.s32 %s165, 1
      %p169 = scmp.eq.s32.totalorder %s21, 1
      %p170 = scmp.ne.s32.totalorder %s165, %s167
      %p171 = scmp.eq.s32.totalorder %s21, 0
      %p172 = por %p170, %p171
      %p173 = scmp.ne.s32.totalorder %s165, %s167
      %p174 = scmp.eq.s32.totalorder %s26, 1
      %p175 = por %p173, %p174
      %p176 = scmp.ne.s32.totalorder %s167, %s168
      %p177 = scmp.eq.s32.totalorder %s26, 0
      %p178 = por %p176, %p177
      %p179 = scmp.ne.s32.totalorder %s167, %s168
      %p180 = scmp.eq.s32.totalorder %s27, 1
      %p181 = por %p179, %p180
      %p183 = scmp.ne.s32.totalorder %s168, %s182
      %p184 = scmp.eq.s32.totalorder %s27, 0
      %p185 = por %p183, %p184
      %s187 = sadd.s32 %s186, 1
      %p190 = scmp.eq.s32.totalorder %s21, 1
      %p191 = scmp.ne.s32.totalorder %s186, %s188
      %p192 = scmp.eq.s32.totalorder %s21, 0
      %p193 = por %p191, %p192
      %p194 = scmp.ne.s32.totalorder %s186, %s188
      %p195 = scmp.eq.s32.totalorder %s26, 1
      %p196 = por %p194, %p195
      %p197 = scmp.ne.s32.totalorder %s188, %s189
      %p198 = scmp.eq.s32.totalorder %s26, 0
      %p199 = por %p197, %p198
      %p200 = scmp.ne.s32.totalorder %s188, %s189
      %p201 = scmp.eq.s32.totalorder %s27, 1
      %p202 = por %p200, %p201
      %p204 = scmp.ne.s32.totalorder %s189, %s203
      %p205 = scmp.eq.s32.totalorder %s27, 0
      %p206 = por %p204, %p205
      %s208 = sadd.s32 %s207, 1
      %p211 = scmp.eq.s32.totalorder %s21, 1
      %p212 = scmp.ne.s32.totalorder %s207, %s209
      %p213 = scmp.eq.s32.totalorder %s21, 0
      %p214 = por %p212, %p213
      %p215 = scmp.ne.s32.totalorder %s207, %s209
      %p216 = scmp.eq.s32.totalorder %s26, 1
      %p217 = por %p215, %p216
      %p218 = scmp.ne.s32.totalorder %s209, %s210
      %p219 = scmp.eq.s32.totalorder %s26, 0
      %p220 = por %p218, %p219
      %p221 = scmp.ne.s32.totalorder %s209, %s210
      %p222 = scmp.eq.s32.totalorder %s27, 1
      %p223 = por %p221, %p222
      %p225 = scmp.ne.s32.totalorder %s210, %s224
      %p226 = scmp.eq.s32.totalorder %s27, 0
      %p227 = por %p225, %p226
      %s228 = ssub.s32 %s21, %s28
      %p229 = scmp.eq.s32.totalorder %s228, 0
      %s231 = sadd.s32 %s230, 1
      %s232 = scalar_select %p229, %s230, %s231
      %p235 = pneg %p229
      %p236 = scmp.eq.s32.totalorder %s21, 1
      %p237 = por %p235, %p236
      %p238 = scmp.ne.s32.totalorder %s230, %s233
      %p239 = scmp.eq.s32.totalorder %s21, 0
      %p240 = por %p238, %p239
      %p241 = scmp.ne.s32.totalorder %s230, %s233
      %p242 = scmp.eq.s32.totalorder %s26, 1
      %p243 = por %p241, %p242
      %p244 = scmp.ne.s32.totalorder %s233, %s234
      %p245 = scmp.eq.s32.totalorder %s26, 0
      %p246 = por %p244, %p245
      %p247 = scmp.ne.s32.totalorder %s233, %s234
      %p248 = scmp.eq.s32.totalorder %s27, 1
      %p249 = por %p247, %p248
      %p251 = scmp.ne.s32.totalorder %s234, %s250
      %p252 = scmp.eq.s32.totalorder %s27, 0
      %p253 = por %p251, %p252
      %p254 = scmp.le.s32.totalorder 1, %s21
      %p255 = scmp.lt.s32.totalorder %s21, 3
      %p256 = pnand %p254, %p255
      %p257 = pneg %p256
      // Predicated region
      $region9: #{tpu_custom_call.1} parent=5 // pred_check
        _
      $region10: #{tpu_custom_call.1} parent=5 // pred_check_branch
        %259 = sbr.rel (%p256) target = $region12
      $region11: #{tpu_custom_call.1} parent=5 // pred_region
        %s260 = ssub.s32 %s21, 1
        // Predicated region
        $region13: #{tpu_custom_call.1} parent=11 // pred_check
          %p261 = pneg %p94
        $region14: #{tpu_custom_call.1} parent=11 // pred_check_branch
          %263 = sbr.rel (%p261) target = $region16
        $region15: #{tpu_custom_call.1} parent=11 // pred_region
          _
        $region16: #{tpu_custom_call.1} parent=11 // pred_fallthru
          _
        // Predicated region
        $region17: #{tpu_custom_call.1} parent=11 // pred_check
          %p264 = pneg %p115
        $region18: #{tpu_custom_call.1} parent=11 // pred_check_branch
          %266 = sbr.rel (%p264) target = $region20
        $region19: #{tpu_custom_call.1} parent=11 // pred_region
          _
        $region20: #{tpu_custom_call.1} parent=11 // pred_fallthru
          _
        // Predicated region
        $region21: #{tpu_custom_call.1} parent=11 // pred_check
          %p267 = pneg %p136
        $region22: #{tpu_custom_call.1} parent=11 // pred_check_branch
          %269 = sbr.rel (%p267) target = $region24
        $region23: #{tpu_custom_call.1} parent=11 // pred_region
          %271 = vsyncadd [#allocation12], 0
          %s272 = sshll.u32 %s5, 4
          %s273 = int_to_ptr.hbm [resolvable:$true] %s272
          %s274 = sshll.u32 [#allocation11], 4
          %s275 = int_to_ptr.vmem [resolvable:$true] %s274
          %280 = dma.hbm_to_vmem [thread:$0]  %s273, 4096, %s275, [#allocation12], 256, 256, 16
        $region24: #{tpu_custom_call.1} parent=11 // pred_fallthru
          _
        // Predicated region
        $region25: #{tpu_custom_call.1} parent=11 // pred_check
          %p281 = pneg %p157
        $region26: #{tpu_custom_call.1} parent=11 // pred_check_branch
          %283 = sbr.rel (%p281) target = $region28
        $region27: #{tpu_custom_call.1} parent=11 // pred_region
          %285 = vsyncadd [#allocation14], 0
          %s286 = sshll.u32 %s6, 4
          %s287 = int_to_ptr.hbm [resolvable:$true] %s286
          %s288 = sshll.u32 [#allocation13], 4
          %s289 = int_to_ptr.vmem [resolvable:$true] %s288
          %294 = dma.hbm_to_vmem [thread:$0]  %s287, 4096, %s289, [#allocation14], 256, 256, 16
        $region28: #{tpu_custom_call.1} parent=11 // pred_fallthru
          _
        // Predicated region
        $region29: #{tpu_custom_call.1} parent=11 // pred_check
          %p295 = pneg %p178
        $region30: #{tpu_custom_call.1} parent=11 // pred_check_branch
          %297 = sbr.rel (%p295) target = $region32
        $region31: #{tpu_custom_call.1} parent=11 // pred_region
          _
        $region32: #{tpu_custom_call.1} parent=11 // pred_fallthru
          _
        // Predicated region
        $region33: #{tpu_custom_call.1} parent=11 // pred_check
          %p298 = pneg %p199
        $region34: #{tpu_custom_call.1} parent=11 // pred_check_branch
          %300 = sbr.rel (%p298) target = $region36
        $region35: #{tpu_custom_call.1} parent=11 // pred_region
          _
        $region36: #{tpu_custom_call.1} parent=11 // pred_fallthru
          _
        // Predicated region
        $region37: #{tpu_custom_call.1} parent=11 // pred_check
          %p301 = pneg %p220
        $region38: #{tpu_custom_call.1} parent=11 // pred_check_branch
          %303 = sbr.rel (%p301) target = $region40
        $region39: #{tpu_custom_call.1} parent=11 // pred_region
          _
        $region40: #{tpu_custom_call.1} parent=11 // pred_fallthru
          _
      $region12: #{tpu_custom_call.1} parent=5 // pred_fallthru
        _
      %p304 = scmp.lt.s32.totalorder %s21, 2
      // Predicated region
      $region41: #{tpu_custom_call.1} parent=5 // pred_check
        %p305 = pneg %p304
      $region42: #{tpu_custom_call.1} parent=5 // pred_check_branch
        %307 = sbr.rel (%p305) target = $region44
      $region43: #{tpu_custom_call.1} parent=5 // pred_region
        // Predicated region
        $region45: #{tpu_custom_call.1} parent=43 // pred_check
          %p308 = pneg %p41
        $region46: #{tpu_custom_call.1} parent=43 // pred_check_branch
          %310 = sbr.rel (%p308) target = $region48
        $region47: #{tpu_custom_call.1} parent=43 // pred_region
          %p311 = scmp.lt.s32.totalorder %s21, 1
          %s312 = scalar_select %p311, %s21, 1
          %s313 = smul.addr %s312, 8
          %s314 = smul.addr %s313, 8
          %s315 = scalar_lea.vmem %s1, %s314
        $region48: #{tpu_custom_call.1} parent=43 // pred_fallthru
          _
        // Predicated region
        $region49: #{tpu_custom_call.1} parent=43 // pred_check
          %p316 = pneg %p67
        $region50: #{tpu_custom_call.1} parent=43 // pred_check_branch
          %318 = sbr.rel (%p316) target = $region52
        $region51: #{tpu_custom_call.1} parent=43 // pred_region
          %p319 = scmp.lt.s32.totalorder %s21, 1
          %s320 = scalar_select %p319, %s21, 1
          %s321 = smul.addr %s320, 8
          %s322 = scalar_lea.vmem %s2, %s321
        $region52: #{tpu_custom_call.1} parent=43 // pred_fallthru
          _
      $region44: #{tpu_custom_call.1} parent=5 // pred_fallthru
        _
      %p323 = scmp.le.s32.totalorder 1, %s21
      %p324 = scmp.lt.s32.totalorder %s21, 3
      %p325 = pnand %p323, %p324
      %p326 = pneg %p325
      // Predicated region
      $region53: #{tpu_custom_call.1} parent=5 // pred_check
        _
      $region54: #{tpu_custom_call.1} parent=5 // pred_check_branch
        %328 = sbr.rel (%p325) target = $region56
      $region55: #{tpu_custom_call.1} parent=5 // pred_region
        %s329 = ssub.s32 %s21, 1
        // Predicated region
        $region57: #{tpu_custom_call.1} parent=55 // pred_check
          %p330 = pneg %p136
        $region58: #{tpu_custom_call.1} parent=55 // pred_check_branch
          %332 = sbr.rel (%p330) target = $region60
        $region59: #{tpu_custom_call.1} parent=55 // pred_region
          %334 = dma.done [#allocation12], 4096
        $region60: #{tpu_custom_call.1} parent=55 // pred_fallthru
          _
        // Predicated region
        $region61: #{tpu_custom_call.1} parent=55 // pred_check
          %p335 = pneg %p157
        $region62: #{tpu_custom_call.1} parent=55 // pred_check_branch
          %337 = sbr.rel (%p335) target = $region64
        $region63: #{tpu_custom_call.1} parent=55 // pred_region
          %339 = dma.done [#allocation14], 4096
        $region64: #{tpu_custom_call.1} parent=55 // pred_fallthru
          _
        %p340 = scmp.lt.s32.totalorder %s26, 1
        %s341 = scalar_select %p340, %s26, 1
        %s342 = smul.addr %s341, 8
        %s343 = smul.addr %s342, 8
        %s344 = scalar_lea.vmem %s1, %s343
        %p345 = pneg %p47
        %p346 = pneg %p44
        %p347 = scmp.lt.s32.totalorder %s26, 1
        %s348 = scalar_select %p347, %s26, 1
        %s349 = smul.addr %s348, 8
        %s350 = scalar_lea.vmem %s2, %s349
        %p351 = pneg %p73
        %p352 = pneg %p70
        %p353 = pneg %p94
        %p354 = pneg %p91
        %p355 = pneg %p115
        %p356 = pneg %p112
        %p357 = pneg %p136
        %p358 = pneg %p133
        %p359 = pneg %p157
        %p360 = pneg %p154
        %p361 = pneg %p178
        %p362 = pneg %p175
        %p363 = pneg %p199
        %p364 = pneg %p196
        %p365 = pneg %p220
        %p366 = pneg %p217
        %p367 = pneg %p246
        %p368 = pneg %p243
        %p369 = scmp.lt.s32.totalorder %s26, 1
        %s370 = scalar_select %p369, %s26, 1
        %s371 = smul.addr %s370, 8
        %s372 = scalar_lea.vmem %s10, %s371
        %p373 = scmp.lt.s32.totalorder %s26, 1
        %s374 = scalar_select %p373, %s26, 1
        %s375 = smul.addr %s374, 8
        %s376 = smul.addr %s375, 8
        %s377 = scalar_lea.vmem %s1, %s376
        %p378 = scmp.lt.s32.totalorder %s26, 1
        %s379 = scalar_select %p378, %s26, 1
        %s380 = smul.addr %s379, 8
        %s381 = scalar_lea.vmem %s2, %s380
        %p382 = scmp.lt.s32.totalorder %s26, 1
        %s383 = scalar_select %p382, %s26, 1
        %s384 = smul.addr %s383, 8
        %s385 = scalar_lea.vmem %s10, %s384
        %v387 = vld [vmem:[%s377] sm:$0xff]
        %v388 = vld [vmem:[%s377 + $0x8] sm:$0xff]
        %v389 = vld [vmem:[%s377 + $0x10] sm:$0xff]
        %v390 = vld [vmem:[%s377 + $0x18] sm:$0xff]
        %v391 = vld [vmem:[%s377 + $0x20] sm:$0xff]
        %v392 = vld [vmem:[%s377 + $0x28] sm:$0xff]
        %v393 = vld [vmem:[%s377 + $0x30] sm:$0xff]
        %v394 = vld [vmem:[%s377 + $0x38] sm:$0xff]
        %v395 = vpack.c.bf16 %v388, %v387
        %v396 = vpack.c.bf16 %v390, %v389
        %v397 = vpack.c.bf16 %v392, %v391
        %v398 = vpack.c.bf16 %v394, %v393
        %v399 = vld [vmem:[%s3] sm:$0xff]
        %v400 = vld [vmem:[%s3 + $0x8] sm:$0xff]
        %v401 = vld [vmem:[%s3 + $0x10] sm:$0xff]
        %v402 = vld [vmem:[%s3 + $0x18] sm:$0xff]
        %v403 = vld [vmem:[%s3 + $0x20] sm:$0xff]
        %v404 = vld [vmem:[%s3 + $0x28] sm:$0xff]
        %v405 = vld [vmem:[%s3 + $0x30] sm:$0xff]
        %v406 = vld [vmem:[%s3 + $0x38] sm:$0xff]
        %v407 = vld [vmem:[%s3 + $0x40] sm:$0xff]
        %v408 = vld [vmem:[%s3 + $0x48] sm:$0xff]
        %v409 = vld [vmem:[%s3 + $0x50] sm:$0xff]
        %v410 = vld [vmem:[%s3 + $0x58] sm:$0xff]
        %v411 = vld [vmem:[%s3 + $0x60] sm:$0x11]
        %v412 = vld [vmem:[%s3 + $0x68] sm:$0x11]
        %v413 = vld [vmem:[%s3 + $0x70] sm:$0x11]
        %v414 = vld [vmem:[%s3 + $0x78] sm:$0x11]
        %v415 = vld [vmem:[%s4] sm:$0xff]
        %v417 = vperm.slane %v415, 0
        %v418 = vperm.slane %v415, 1
        %v419 = vperm.slane %v415, 2
        %v420 = vperm.slane %v415, 3
        %v421 = vperm.slane %v415, 4
        %v422 = vperm.slane %v415, 5
        %v423 = vperm.slane %v415, 6
        %v424 = vperm.slane %v415, 7
        %v449 = vunpack.c.l.b16 %v399
        %v450 = vunpack.c.h.b16 %v399
        %v451 = vunpack.c.l.b16 %v400
        %v452 = vunpack.c.h.b16 %v400
        %v453 = vunpack.c.l.b16 %v401
        %v454 = vunpack.c.h.b16 %v401
        %v455 = vunpack.c.l.b16 %v402
        %v456 = vunpack.c.h.b16 %v402
        %v457 = vunpack.c.l.b16 %v403
        %v458 = vunpack.c.h.b16 %v403
        %v459 = vunpack.c.l.b16 %v404
        %v460 = vunpack.c.h.b16 %v404
        %v461 = vunpack.c.l.b16 %v405
        %v462 = vunpack.c.h.b16 %v405
        %v463 = vunpack.c.l.b16 %v406
        %v464 = vunpack.c.h.b16 %v406
        %v465 = vunpack.c.l.b16 %v407
        %v466 = vunpack.c.h.b16 %v407
        %v467 = vunpack.c.l.b16 %v408
        %v468 = vunpack.c.h.b16 %v408
        %v469 = vunpack.c.l.b16 %v409
        %v470 = vunpack.c.h.b16 %v409
        %v471 = vunpack.c.l.b16 %v410
        %v472 = vunpack.c.h.b16 %v410
        %v473 = vunpack.c.l.b16 %v411
        %v474 = vunpack.c.h.b16 %v411
        %v475 = vunpack.c.l.b16 %v412
        %v476 = vunpack.c.h.b16 %v412
        %v477 = vunpack.c.l.b16 %v413
        %v478 = vunpack.c.h.b16 %v413
        %v479 = vunpack.c.l.b16 %v414
        %v480 = vunpack.c.h.b16 %v414
        %v481 = vpack.c.b16 %v457, %v449
        %v482 = vpack.c.b16 %v458, %v450
        %v483 = vpack.c.b16 %v459, %v451
        %v484 = vpack.c.b16 %v460, %v452
        %v485 = vpack.c.b16 %v461, %v453
        %v486 = vpack.c.b16 %v462, %v454
        %v487 = vpack.c.b16 %v463, %v455
        %v488 = vpack.c.b16 %v464, %v456
        %v489 = vpack.c.b16 %v473, %v465
        %v490 = vpack.c.b16 %v474, %v466
        %v491 = vpack.c.b16 %v475, %v467
        %v492 = vpack.c.b16 %v476, %v468
        %v493 = vpack.c.b16 %v477, %v469
        %v494 = vpack.c.b16 %v478, %v470
        %v495 = vpack.c.b16 %v479, %v471
        %v496 = vpack.c.b16 %v480, %v472
        %vm505 = vcmask 203776
        %v507 = vsel %vm505, %v395, 0
        %v510 = vsel %vm505, %v396, 0
        %v513 = vsel %vm505, %v397, 0
        %v516 = vsel %vm505, %v398, 0
        %vm518 = vcmask 1043456
        %vm519 = vcmask 1044480
        %v520 = vsel %vm518, 4294967295, 65535
        %v521 = vsel %vm519, %v520, 0
        %v523 = vand.u32 %v489, %v521
        %v526 = vand.u32 %v490, %v521
        %v529 = vand.u32 %v491, %v521
        %v532 = vand.u32 %v492, %v521
        %v535 = vand.u32 %v493, %v521
        %v538 = vand.u32 %v494, %v521
        %v541 = vand.u32 %v495, %v521
        %v544 = vand.u32 %v496, %v521
        %546 = vmatpush.bf16.msra.mxu0 0
        %547 = vmatpush.bf16.msra.mxu0 0
        %548 = vmatpush.bf16.msra.mxu0 0
        %549 = vmatpush.bf16.msra.mxu0 0
        %550 = vmatpush.bf16.msra.mxu0 0
        %551 = vmatpush.bf16.msra.mxu0 0
        %552 = vmatpush.bf16.msra.mxu0 %v523
        %553 = vmatpush.bf16.msra.mxu0 %v481
        %554 = vmatmul.bf16.gmra.mxu0 %v507
        %v555 = vpop.f32.mrf.mxu0
        %v556 = vadd.f32 %v417, %v555
        %v557 = vpop.f32.mrf.mxu0
        %v558 = vadd.f32 %v417, %v557
        %559 = vmatmul.bf16.gmra.mxu0 %v510
        %v560 = vpop.f32.mrf.mxu0
        %v561 = vadd.f32 %v417, %v560
        %v562 = vpop.f32.mrf.mxu0
        %v563 = vadd.f32 %v417, %v562
        %564 = vmatmul.bf16.gmra.mxu0 %v513
        %v565 = vpop.f32.mrf.mxu0
        %v566 = vadd.f32 %v417, %v565
        %v567 = vpop.f32.mrf.mxu0
        %v568 = vadd.f32 %v417, %v567
        %569 = vmatmul.bf16.gmra.mxu0 %v516
        %v570 = vpop.f32.mrf.mxu0
        %v571 = vadd.f32 %v417, %v570
        %v572 = vpop.f32.mrf.mxu0
        %v573 = vadd.f32 %v417, %v572
        %574 = vdwg.mxu0
        %575 = vmatpush.bf16.msra.mxu0 0
        %576 = vmatpush.bf16.msra.mxu0 0
        %577 = vmatpush.bf16.msra.mxu0 0
        %578 = vmatpush.bf16.msra.mxu0 0
        %579 = vmatpush.bf16.msra.mxu0 0
        %580 = vmatpush.bf16.msra.mxu0 0
        %581 = vmatpush.bf16.msra.mxu0 %v526
        %582 = vmatpush.bf16.msra.mxu0 %v482
        %583 = vmatmul.bf16.gmra.mxu0 %v507
        %v584 = vpop.f32.mrf.mxu0
        %v585 = vadd.f32 %v418, %v584
        %v586 = vpop.f32.mrf.mxu0
        %v587 = vadd.f32 %v418, %v586
        %588 = vmatmul.bf16.gmra.mxu0 %v510
        %v589 = vpop.f32.mrf.mxu0
        %v590 = vadd.f32 %v418, %v589
        %v591 = vpop.f32.mrf.mxu0
        %v592 = vadd.f32 %v418, %v591
        %593 = vmatmul.bf16.gmra.mxu0 %v513
        %v594 = vpop.f32.mrf.mxu0
        %v595 = vadd.f32 %v418, %v594
        %v596 = vpop.f32.mrf.mxu0
        %v597 = vadd.f32 %v418, %v596
        %598 = vmatmul.bf16.gmra.mxu0 %v516
        %v599 = vpop.f32.mrf.mxu0
        %v600 = vadd.f32 %v418, %v599
        %v601 = vpop.f32.mrf.mxu0
        %v602 = vadd.f32 %v418, %v601
        %603 = vdwg.mxu0
        %604 = vmatpush.bf16.msra.mxu0 0
        %605 = vmatpush.bf16.msra.mxu0 0
        %606 = vmatpush.bf16.msra.mxu0 0
        %607 = vmatpush.bf16.msra.mxu0 0
        %608 = vmatpush.bf16.msra.mxu0 0
        %609 = vmatpush.bf16.msra.mxu0 0
        %610 = vmatpush.bf16.msra.mxu0 %v529
        %611 = vmatpush.bf16.msra.mxu0 %v483
        %612 = vmatmul.bf16.gmra.mxu0 %v507
        %v613 = vpop.f32.mrf.mxu0
        %v614 = vadd.f32 %v419, %v613
        %v615 = vpop.f32.mrf.mxu0
        %v616 = vadd.f32 %v419, %v615
        %617 = vmatmul.bf16.gmra.mxu0 %v510
        %v618 = vpop.f32.mrf.mxu0
        %v619 = vadd.f32 %v419, %v618
        %v620 = vpop.f32.mrf.mxu0
        %v621 = vadd.f32 %v419, %v620
        %622 = vmatmul.bf16.gmra.mxu0 %v513
        %v623 = vpop.f32.mrf.mxu0
        %v624 = vadd.f32 %v419, %v623
        %v625 = vpop.f32.mrf.mxu0
        %v626 = vadd.f32 %v419, %v625
        %627 = vmatmul.bf16.gmra.mxu0 %v516
        %v628 = vpop.f32.mrf.mxu0
        %v629 = vadd.f32 %v419, %v628
        %v630 = vpop.f32.mrf.mxu0
        %v631 = vadd.f32 %v419, %v630
        %632 = vdwg.mxu0
        %633 = vmatpush.bf16.msra.mxu0 0
        %634 = vmatpush.bf16.msra.mxu0 0
        %635 = vmatpush.bf16.msra.mxu0 0
        %636 = vmatpush.bf16.msra.mxu0 0
        %637 = vmatpush.bf16.msra.mxu0 0
        %638 = vmatpush.bf16.msra.mxu0 0
        %639 = vmatpush.bf16.msra.mxu0 %v532
        %640 = vmatpush.bf16.msra.mxu0 %v484
        %641 = vmatmul.bf16.gmra.mxu0 %v507
        %v642 = vpop.f32.mrf.mxu0
        %v643 = vadd.f32 %v420, %v642
        %v644 = vpop.f32.mrf.mxu0
        %v645 = vadd.f32 %v420, %v644
        %646 = vmatmul.bf16.gmra.mxu0 %v510
        %v647 = vpop.f32.mrf.mxu0
        %v648 = vadd.f32 %v420, %v647
        %v649 = vpop.f32.mrf.mxu0
        %v650 = vadd.f32 %v420, %v649
        %651 = vmatmul.bf16.gmra.mxu0 %v513
        %v652 = vpop.f32.mrf.mxu0
        %v653 = vadd.f32 %v420, %v652
        %v654 = vpop.f32.mrf.mxu0
        %v655 = vadd.f32 %v420, %v654
        %656 = vmatmul.bf16.gmra.mxu0 %v516
        %v657 = vpop.f32.mrf.mxu0
        %v658 = vadd.f32 %v420, %v657
        %v659 = vpop.f32.mrf.mxu0
        %v660 = vadd.f32 %v420, %v659
        %661 = vdwg.mxu0
        %662 = vmatpush.bf16.msra.mxu0 0
        %663 = vmatpush.bf16.msra.mxu0 0
        %664 = vmatpush.bf16.msra.mxu0 0
        %665 = vmatpush.bf16.msra.mxu0 0
        %666 = vmatpush.bf16.msra.mxu0 0
        %667 = vmatpush.bf16.msra.mxu0 0
        %668 = vmatpush.bf16.msra.mxu0 %v535
        %669 = vmatpush.bf16.msra.mxu0 %v485
        %670 = vmatmul.bf16.gmra.mxu0 %v507
        %v671 = vpop.f32.mrf.mxu0
        %v672 = vadd.f32 %v421, %v671
        %v673 = vpop.f32.mrf.mxu0
        %v674 = vadd.f32 %v421, %v673
        %675 = vmatmul.bf16.gmra.mxu0 %v510
        %v676 = vpop.f32.mrf.mxu0
        %v677 = vadd.f32 %v421, %v676
        %v678 = vpop.f32.mrf.mxu0
        %v679 = vadd.f32 %v421, %v678
        %680 = vmatmul.bf16.gmra.mxu0 %v513
        %v681 = vpop.f32.mrf.mxu0
        %v682 = vadd.f32 %v421, %v681
        %v683 = vpop.f32.mrf.mxu0
        %v684 = vadd.f32 %v421, %v683
        %685 = vmatmul.bf16.gmra.mxu0 %v516
        %v686 = vpop.f32.mrf.mxu0
        %v687 = vadd.f32 %v421, %v686
        %v688 = vpop.f32.mrf.mxu0
        %v689 = vadd.f32 %v421, %v688
        %690 = vdwg.mxu0
        %691 = vmatpush.bf16.msra.mxu0 0
        %692 = vmatpush.bf16.msra.mxu0 0
        %693 = vmatpush.bf16.msra.mxu0 0
        %694 = vmatpush.bf16.msra.mxu0 0
        %695 = vmatpush.bf16.msra.mxu0 0
        %696 = vmatpush.bf16.msra.mxu0 0
        %697 = vmatpush.bf16.msra.mxu0 %v538
        %698 = vmatpush.bf16.msra.mxu0 %v486
        %699 = vmatmul.bf16.gmra.mxu0 %v507
        %v700 = vpop.f32.mrf.mxu0
        %v701 = vadd.f32 %v422, %v700
        %v702 = vpop.f32.mrf.mxu0
        %v703 = vadd.f32 %v422, %v702
        %704 = vmatmul.bf16.gmra.mxu0 %v510
        %v705 = vpop.f32.mrf.mxu0
        %v706 = vadd.f32 %v422, %v705
        %v707 = vpop.f32.mrf.mxu0
        %v708 = vadd.f32 %v422, %v707
        %709 = vmatmul.bf16.gmra.mxu0 %v513
        %v710 = vpop.f32.mrf.mxu0
        %v711 = vadd.f32 %v422, %v710
        %v712 = vpop.f32.mrf.mxu0
        %v713 = vadd.f32 %v422, %v712
        %714 = vmatmul.bf16.gmra.mxu0 %v516
        %v715 = vpop.f32.mrf.mxu0
        %v716 = vadd.f32 %v422, %v715
        %v717 = vpop.f32.mrf.mxu0
        %v718 = vadd.f32 %v422, %v717
        %719 = vdwg.mxu0
        %720 = vmatpush.bf16.msra.mxu0 0
        %721 = vmatpush.bf16.msra.mxu0 0
        %722 = vmatpush.bf16.msra.mxu0 0
        %723 = vmatpush.bf16.msra.mxu0 0
        %724 = vmatpush.bf16.msra.mxu0 0
        %725 = vmatpush.bf16.msra.mxu0 0
        %726 = vmatpush.bf16.msra.mxu0 %v541
        %727 = vmatpush.bf16.msra.mxu0 %v487
        %728 = vmatmul.bf16.gmra.mxu0 %v507
        %v729 = vpop.f32.mrf.mxu0
        %v730 = vadd.f32 %v423, %v729
        %v731 = vpop.f32.mrf.mxu0
        %v732 = vadd.f32 %v423, %v731
        %733 = vmatmul.bf16.gmra.mxu0 %v510
        %v734 = vpop.f32.mrf.mxu0
        %v735 = vadd.f32 %v423, %v734
        %v736 = vpop.f32.mrf.mxu0
        %v737 = vadd.f32 %v423, %v736
        %738 = vmatmul.bf16.gmra.mxu0 %v513
        %v739 = vpop.f32.mrf.mxu0
        %v740 = vadd.f32 %v423, %v739
        %v741 = vpop.f32.mrf.mxu0
        %v742 = vadd.f32 %v423, %v741
        %743 = vmatmul.bf16.gmra.mxu0 %v516
        %v744 = vpop.f32.mrf.mxu0
        %v745 = vadd.f32 %v423, %v744
        %v746 = vpop.f32.mrf.mxu0
        %v747 = vadd.f32 %v423, %v746
        %748 = vdwg.mxu0
        %749 = vmatpush.bf16.msra.mxu0 0
        %750 = vmatpush.bf16.msra.mxu0 0
        %751 = vmatpush.bf16.msra.mxu0 0
        %752 = vmatpush.bf16.msra.mxu0 0
        %753 = vmatpush.bf16.msra.mxu0 0
        %754 = vmatpush.bf16.msra.mxu0 0
        %755 = vmatpush.bf16.msra.mxu0 %v544
        %756 = vmatpush.bf16.msra.mxu0 %v488
        %757 = vmatmul.bf16.gmra.mxu0 %v507
        %v758 = vpop.f32.mrf.mxu0
        %v759 = vadd.f32 %v424, %v758
        %v760 = vpop.f32.mrf.mxu0
        %v761 = vadd.f32 %v424, %v760
        %762 = vmatmul.bf16.gmra.mxu0 %v510
        %v763 = vpop.f32.mrf.mxu0
        %v764 = vadd.f32 %v424, %v763
        %v765 = vpop.f32.mrf.mxu0
        %v766 = vadd.f32 %v424, %v765
        %767 = vmatmul.bf16.gmra.mxu0 %v513
        %v768 = vpop.f32.mrf.mxu0
        %v769 = vadd.f32 %v424, %v768
        %v770 = vpop.f32.mrf.mxu0
        %v771 = vadd.f32 %v424, %v770
        %772 = vmatmul.bf16.gmra.mxu0 %v516
        %v773 = vpop.f32.mrf.mxu0
        %v774 = vadd.f32 %v424, %v773
        %v775 = vpop.f32.mrf.mxu0
        %v776 = vadd.f32 %v424, %v775
        %777 = vdwg.mxu0
        %778 = vst [vmem:[#allocation2] sm:$0xff] %v556
        %779 = vst [vmem:[#allocation2 + $0x8] sm:$0xff] %v585
        %780 = vst [vmem:[#allocation2 + $0x10] sm:$0xff] %v614
        %781 = vst [vmem:[#allocation2 + $0x18] sm:$0xff] %v643
        %782 = vst [vmem:[#allocation2 + $0x20] sm:$0xff] %v558
        %783 = vst [vmem:[#allocation2 + $0x28] sm:$0xff] %v587
        %784 = vst [vmem:[#allocation2 + $0x30] sm:$0xff] %v616
        %785 = vst [vmem:[#allocation2 + $0x38] sm:$0xff] %v645
        %786 = vst [vmem:[#allocation2 + $0x40] sm:$0xff] %v561
        %787 = vst [vmem:[#allocation2 + $0x48] sm:$0xff] %v590
        %788 = vst [vmem:[#allocation2 + $0x50] sm:$0xff] %v619
        %789 = vst [vmem:[#allocation2 + $0x58] sm:$0xff] %v648
        %790 = vst [vmem:[#allocation2 + $0x60] sm:$0xff] %v563
        %791 = vst [vmem:[#allocation2 + $0x68] sm:$0xff] %v592
        %792 = vst [vmem:[#allocation2 + $0x70] sm:$0xff] %v621
        %793 = vst [vmem:[#allocation2 + $0x78] sm:$0xff] %v650
        %794 = vst [vmem:[#allocation2 + $0x80] sm:$0xff] %v566
        %795 = vst [vmem:[#allocation2 + $0x88] sm:$0xff] %v595
        %796 = vst [vmem:[#allocation2 + $0x90] sm:$0xff] %v624
        %797 = vst [vmem:[#allocation2 + $0x98] sm:$0xff] %v653
        %798 = vst [vmem:[#allocation2 + $0xa0] sm:$0xff] %v568
        %799 = vst [vmem:[#allocation2 + $0xa8] sm:$0xff] %v597
        %800 = vst [vmem:[#allocation2 + $0xb0] sm:$0xff] %v626
        %801 = vst [vmem:[#allocation2 + $0xb8] sm:$0xff] %v655
        %802 = vst [vmem:[#allocation2 + $0xc0] sm:$0xff] %v571
        %803 = vst [vmem:[#allocation2 + $0xc8] sm:$0xff] %v600
        %804 = vst [vmem:[#allocation2 + $0xd0] sm:$0xff] %v629
        %805 = vst [vmem:[#allocation2 + $0xd8] sm:$0xff] %v658
        %806 = vst [vmem:[#allocation2 + $0xe0] sm:$0xff] %v573
        %807 = vst [vmem:[#allocation2 + $0xe8] sm:$0xff] %v602
        %808 = vst [vmem:[#allocation2 + $0xf0] sm:$0xff] %v631
        %809 = vst [vmem:[#allocation2 + $0xf8] sm:$0xff] %v660
        %810 = vst [vmem:[#allocation3] sm:$0xff] %v672
        %811 = vst [vmem:[#allocation3 + $0x8] sm:$0xff] %v701
        %812 = vst [vmem:[#allocation3 + $0x10] sm:$0xff] %v730
        %813 = vst [vmem:[#allocation3 + $0x18] sm:$0xff] %v759
        %814 = vst [vmem:[#allocation3 + $0x20] sm:$0xff] %v674
        %815 = vst [vmem:[#allocation3 + $0x28] sm:$0xff] %v703
        %816 = vst [vmem:[#allocation3 + $0x30] sm:$0xff] %v732
        %817 = vst [vmem:[#allocation3 + $0x38] sm:$0xff] %v761
        %818 = vst [vmem:[#allocation3 + $0x40] sm:$0xff] %v677
        %819 = vst [vmem:[#allocation3 + $0x48] sm:$0xff] %v706
        %820 = vst [vmem:[#allocation3 + $0x50] sm:$0xff] %v735
        %821 = vst [vmem:[#allocation3 + $0x58] sm:$0xff] %v764
        %822 = vst [vmem:[#allocation3 + $0x60] sm:$0xff] %v679
        %823 = vst [vmem:[#allocation3 + $0x68] sm:$0xff] %v708
        %824 = vst [vmem:[#allocation3 + $0x70] sm:$0xff] %v737
        %825 = vst [vmem:[#allocation3 + $0x78] sm:$0xff] %v766
        %826 = vst [vmem:[#allocation3 + $0x80] sm:$0xff] %v682
        %827 = vst [vmem:[#allocation3 + $0x88] sm:$0xff] %v711
        %828 = vst [vmem:[#allocation3 + $0x90] sm:$0xff] %v740
        %829 = vst [vmem:[#allocation3 + $0x98] sm:$0xff] %v769
        %830 = vst [vmem:[#allocation3 + $0xa0] sm:$0xff] %v684
        %831 = vst [vmem:[#allocation3 + $0xa8] sm:$0xff] %v713
        %832 = vst [vmem:[#allocation3 + $0xb0] sm:$0xff] %v742
        %833 = vst [vmem:[#allocation3 + $0xb8] sm:$0xff] %v771
        %834 = vst [vmem:[#allocation3 + $0xc0] sm:$0xff] %v687
        %835 = vst [vmem:[#allocation3 + $0xc8] sm:$0xff] %v716
        %836 = vst [vmem:[#allocation3 + $0xd0] sm:$0xff] %v745
        %837 = vst [vmem:[#allocation3 + $0xd8] sm:$0xff] %v774
        %838 = vst [vmem:[#allocation3 + $0xe0] sm:$0xff] %v689
        %839 = vst [vmem:[#allocation3 + $0xe8] sm:$0xff] %v718
        %840 = vst [vmem:[#allocation3 + $0xf0] sm:$0xff] %v747
        %841 = vst [vmem:[#allocation3 + $0xf8] sm:$0xff] %v776
        %v842 = vld [vmem:[#allocation11] sm:$0xff]
        %v843 = vld [vmem:[#allocation11 + $0x8] sm:$0xff]
        %v844 = vld [vmem:[#allocation11 + $0x10] sm:$0xff]
        %v845 = vld [vmem:[#allocation11 + $0x18] sm:$0xff]
        %v846 = vld [vmem:[#allocation11 + $0x20] sm:$0xff]
        %v847 = vld [vmem:[#allocation11 + $0x28] sm:$0xff]
        %v848 = vld [vmem:[#allocation11 + $0x30] sm:$0xff]
        %v849 = vld [vmem:[#allocation11 + $0x38] sm:$0xff]
        %v850 = vld [vmem:[#allocation11 + $0x40] sm:$0xff]
        %v851 = vld [vmem:[#allocation11 + $0x48] sm:$0xff]
        %v852 = vld [vmem:[#allocation11 + $0x50] sm:$0xff]
        %v853 = vld [vmem:[#allocation11 + $0x58] sm:$0xff]
        %v854 = vld [vmem:[#allocation11 + $0x60] sm:$0xff]
        %v855 = vld [vmem:[#allocation11 + $0x68] sm:$0xff]
        %v856 = vld [vmem:[#allocation11 + $0x70] sm:$0xff]
        %v857 = vld [vmem:[#allocation11 + $0x78] sm:$0xff]
        %v858 = vld [vmem:[#allocation11 + $0x80] sm:$0xff]
        %v859 = vld [vmem:[#allocation11 + $0x88] sm:$0xff]
        %v860 = vld [vmem:[#allocation11 + $0x90] sm:$0xff]
        %v861 = vld [vmem:[#allocation11 + $0x98] sm:$0xff]
        %v862 = vld [vmem:[#allocation11 + $0xa0] sm:$0xff]
        %v863 = vld [vmem:[#allocation11 + $0xa8] sm:$0xff]
        %v864 = vld [vmem:[#allocation11 + $0xb0] sm:$0xff]
        %v865 = vld [vmem:[#allocation11 + $0xb8] sm:$0xff]
        %v866 = vld [vmem:[#allocation11 + $0xc0] sm:$0xff]
        %v867 = vld [vmem:[#allocation11 + $0xc8] sm:$0xff]
        %v868 = vld [vmem:[#allocation11 + $0xd0] sm:$0xff]
        %v869 = vld [vmem:[#allocation11 + $0xd8] sm:$0xff]
        %v870 = vld [vmem:[#allocation11 + $0xe0] sm:$0xff]
        %v871 = vld [vmem:[#allocation11 + $0xe8] sm:$0xff]
        %v872 = vld [vmem:[#allocation11 + $0xf0] sm:$0xff]
        %v873 = vld [vmem:[#allocation11 + $0xf8] sm:$0xff]
        %v874 = vld [vmem:[#allocation13] sm:$0xff]
        %v875 = vld [vmem:[#allocation13 + $0x8] sm:$0xff]
        %v876 = vld [vmem:[#allocation13 + $0x10] sm:$0xff]
        %v877 = vld [vmem:[#allocation13 + $0x18] sm:$0xff]
        %v878 = vld [vmem:[#allocation13 + $0x20] sm:$0xff]
        %v879 = vld [vmem:[#allocation13 + $0x28] sm:$0xff]
        %v880 = vld [vmem:[#allocation13 + $0x30] sm:$0xff]
        %v881 = vld [vmem:[#allocation13 + $0x38] sm:$0xff]
        %v882 = vld [vmem:[#allocation13 + $0x40] sm:$0xff]
        %v883 = vld [vmem:[#allocation13 + $0x48] sm:$0xff]
        %v884 = vld [vmem:[#allocation13 + $0x50] sm:$0xff]
        %v885 = vld [vmem:[#allocation13 + $0x58] sm:$0xff]
        %v886 = vld [vmem:[#allocation13 + $0x60] sm:$0xff]
        %v887 = vld [vmem:[#allocation13 + $0x68] sm:$0xff]
        %v888 = vld [vmem:[#allocation13 + $0x70] sm:$0xff]
        %v889 = vld [vmem:[#allocation13 + $0x78] sm:$0xff]
        %v890 = vld [vmem:[#allocation13 + $0x80] sm:$0xff]
        %v891 = vld [vmem:[#allocation13 + $0x88] sm:$0xff]
        %v892 = vld [vmem:[#allocation13 + $0x90] sm:$0xff]
        %v893 = vld [vmem:[#allocation13 + $0x98] sm:$0xff]
        %v894 = vld [vmem:[#allocation13 + $0xa0] sm:$0xff]
        %v895 = vld [vmem:[#allocation13 + $0xa8] sm:$0xff]
        %v896 = vld [vmem:[#allocation13 + $0xb0] sm:$0xff]
        %v897 = vld [vmem:[#allocation13 + $0xb8] sm:$0xff]
        %v898 = vld [vmem:[#allocation13 + $0xc0] sm:$0xff]
        %v899 = vld [vmem:[#allocation13 + $0xc8] sm:$0xff]
        %v900 = vld [vmem:[#allocation13 + $0xd0] sm:$0xff]
        %v901 = vld [vmem:[#allocation13 + $0xd8] sm:$0xff]
        %v902 = vld [vmem:[#allocation13 + $0xe0] sm:$0xff]
        %v903 = vld [vmem:[#allocation13 + $0xe8] sm:$0xff]
        %v904 = vld [vmem:[#allocation13 + $0xf0] sm:$0xff]
        %v905 = vld [vmem:[#allocation13 + $0xf8] sm:$0xff]
        %v906 = vld [vmem:[%s381] sm:$0xff]
        %s907 = sld [smem:[#allocation9]]
        %908 = vst [vmem:[#allocation4] sm:$0xff] 0.0
        %909 = vst [vmem:[#allocation5] sm:$0xff] 0.0
        %910 = vst [vmem:[#allocation6] sm:$0xff] 0.0
        %911 = vst [vmem:[#allocation7] sm:$0xff] 0.0
        // While loop
        $region65: #{tpu_custom_call.1} parent=55 // loop_pre_header
          _
        $region66: #{tpu_custom_call.1} parent=55 // loop_header
          %s913 = sphi 0, %s915
          %p914 = scmp.ge.s32.totalorder %s913, %s907
        $region67: #{tpu_custom_call.1} parent=55 // loop_header_branch
          %917 = sbr.rel (%p914) target = $region71
        $region68: #{tpu_custom_call.1} parent=55 // loop_body
          %s918 = smul.u32 %s913, 8
          %s919 = sshra.s32 %s918, 3
          %s920 = sand.u32 %s918, 7
          %s921 = smul.u32 %s919, 4
          %s922 = smul.addr %s921, 8
          %s923 = scalar_lea.vmem [#allocation2], %s922
          %v924 = vld [vmem:[%s923] sm:$0xff]
          %v925 = vld [vmem:[%s923 + $0x8] sm:$0xff]
          %v926 = vld [vmem:[%s923 + $0x10] sm:$0xff]
          %v927 = vld [vmem:[%s923 + $0x18] sm:$0xff]
          %v928 = vstv %s913
          %vm929 = vcmp.lt.s32.totalorder %v928, %v906
          %v930 = vld [vmem:[#allocation4] sm:$0xff]
          %v931 = vpack.c.bf16 %v930, %v930
          %v964 = vunpack.c.l.b16 %v842
          %v965 = vunpack.c.h.b16 %v842
          %v966 = vunpack.c.l.b16 %v843
          %v967 = vunpack.c.h.b16 %v843
          %v968 = vunpack.c.l.b16 %v844
          %v969 = vunpack.c.h.b16 %v844
          %v970 = vunpack.c.l.b16 %v845
          %v971 = vunpack.c.h.b16 %v845
          %v972 = vunpack.c.l.b16 %v846
          %v973 = vunpack.c.h.b16 %v846
          %v974 = vunpack.c.l.b16 %v847
          %v975 = vunpack.c.h.b16 %v847
          %v976 = vunpack.c.l.b16 %v848
          %v977 = vunpack.c.h.b16 %v848
          %v978 = vunpack.c.l.b16 %v849
          %v979 = vunpack.c.h.b16 %v849
          %v980 = vunpack.c.l.b16 %v850
          %v981 = vunpack.c.h.b16 %v850
          %v982 = vunpack.c.l.b16 %v851
          %v983 = vunpack.c.h.b16 %v851
          %v984 = vunpack.c.l.b16 %v852
          %v985 = vunpack.c.h.b16 %v852
          %v986 = vunpack.c.l.b16 %v853
          %v987 = vunpack.c.h.b16 %v853
          %v988 = vunpack.c.l.b16 %v854
          %v989 = vunpack.c.h.b16 %v854
          %v990 = vunpack.c.l.b16 %v855
          %v991 = vunpack.c.h.b16 %v855
          %v992 = vunpack.c.l.b16 %v856
          %v993 = vunpack.c.h.b16 %v856
          %v994 = vunpack.c.l.b16 %v857
          %v995 = vunpack.c.h.b16 %v857
          %v996 = vunpack.c.l.b16 %v858
          %v997 = vunpack.c.h.b16 %v858
          %v998 = vunpack.c.l.b16 %v859
          %v999 = vunpack.c.h.b16 %v859
          %v1000 = vunpack.c.l.b16 %v860
          %v1001 = vunpack.c.h.b16 %v860
          %v1002 = vunpack.c.l.b16 %v861
          %v1003 = vunpack.c.h.b16 %v861
          %v1004 = vunpack.c.l.b16 %v862
          %v1005 = vunpack.c.h.b16 %v862
          %v1006 = vunpack.c.l.b16 %v863
          %v1007 = vunpack.c.h.b16 %v863
          %v1008 = vunpack.c.l.b16 %v864
          %v1009 = vunpack.c.h.b16 %v864
          %v1010 = vunpack.c.l.b16 %v865
          %v1011 = vunpack.c.h.b16 %v865
          %v1012 = vunpack.c.l.b16 %v866
          %v1013 = vunpack.c.h.b16 %v866
          %v1014 = vunpack.c.l.b16 %v867
          %v1015 = vunpack.c.h.b16 %v867
          %v1016 = vunpack.c.l.b16 %v868
          %v1017 = vunpack.c.h.b16 %v868
          %v1018 = vunpack.c.l.b16 %v869
          %v1019 = vunpack.c.h.b16 %v869
          %v1020 = vunpack.c.l.b16 %v870
          %v1021 = vunpack.c.h.b16 %v870
          %v1022 = vunpack.c.l.b16 %v871
          %v1023 = vunpack.c.h.b16 %v871
          %v1024 = vunpack.c.l.b16 %v872
          %v1025 = vunpack.c.h.b16 %v872
          %v1026 = vunpack.c.l.b16 %v873
          %v1027 = vunpack.c.h.b16 %v873
          %v1028 = vpack.c.b16 %v968, %v964
          %v1029 = vpack.c.b16 %v969, %v965
          %v1030 = vpack.c.b16 %v970, %v966
          %v1031 = vpack.c.b16 %v971, %v967
          %v1032 = vpack.c.b16 %v976, %v972
          %v1033 = vpack.c.b16 %v977, %v973
          %v1034 = vpack.c.b16 %v978, %v974
          %v1035 = vpack.c.b16 %v979, %v975
          %v1036 = vpack.c.b16 %v984, %v980
          %v1037 = vpack.c.b16 %v985, %v981
          %v1038 = vpack.c.b16 %v986, %v982
          %v1039 = vpack.c.b16 %v987, %v983
          %v1040 = vpack.c.b16 %v992, %v988
          %v1041 = vpack.c.b16 %v993, %v989
          %v1042 = vpack.c.b16 %v994, %v990
          %v1043 = vpack.c.b16 %v995, %v991
          %v1044 = vpack.c.b16 %v1000, %v996
          %v1045 = vpack.c.b16 %v1001, %v997
          %v1046 = vpack.c.b16 %v1002, %v998
          %v1047 = vpack.c.b16 %v1003, %v999
          %v1048 = vpack.c.b16 %v1008, %v1004
          %v1049 = vpack.c.b16 %v1009, %v1005
          %v1050 = vpack.c.b16 %v1010, %v1006
          %v1051 = vpack.c.b16 %v1011, %v1007
          %v1052 = vpack.c.b16 %v1016, %v1012
          %v1053 = vpack.c.b16 %v1017, %v1013
          %v1054 = vpack.c.b16 %v1018, %v1014
          %v1055 = vpack.c.b16 %v1019, %v1015
          %v1056 = vpack.c.b16 %v1024, %v1020
          %v1057 = vpack.c.b16 %v1025, %v1021
          %v1058 = vpack.c.b16 %v1026, %v1022
          %v1059 = vpack.c.b16 %v1027, %v1023
          %1092 = vmatpush.bf16.msra.mxu0 %v1056
          %1093 = vmatpush.bf16.msra.mxu0 %v1052
          %1094 = vmatpush.bf16.msra.mxu0 %v1048
          %1095 = vmatpush.bf16.msra.mxu0 %v1044
          %1096 = vmatpush.bf16.msra.mxu0 %v1040
          %1097 = vmatpush.bf16.msra.mxu0 %v1036
          %1098 = vmatpush.bf16.msra.mxu0 %v1032
          %1099 = vmatpush.bf16.msra.mxu0 %v1028
          %1100 = vmatmul.bf16.gmra.mxu0 %v931
          %v1101 = vpop.f32.mrf.mxu0
          %v1102 = vadd.f32 0.0, %v1101
          %v1103 = vpop.f32.mrf.mxu0
          %1104 = vdwg.mxu0
          %1105 = vmatpush.bf16.msra.mxu0 %v1057
          %1106 = vmatpush.bf16.msra.mxu0 %v1053
          %1107 = vmatpush.bf16.msra.mxu0 %v1049
          %1108 = vmatpush.bf16.msra.mxu0 %v1045
          %1109 = vmatpush.bf16.msra.mxu0 %v1041
          %1110 = vmatpush.bf16.msra.mxu0 %v1037
          %1111 = vmatpush.bf16.msra.mxu0 %v1033
          %1112 = vmatpush.bf16.msra.mxu0 %v1029
          %1113 = vmatmul.bf16.gmra.mxu0 %v931
          %v1114 = vpop.f32.mrf.mxu0
          %v1115 = vadd.f32 0.0, %v1114
          %v1116 = vpop.f32.mrf.mxu0
          %1117 = vdwg.mxu0
          %1118 = vmatpush.bf16.msra.mxu0 %v1058
          %1119 = vmatpush.bf16.msra.mxu0 %v1054
          %1120 = vmatpush.bf16.msra.mxu0 %v1050
          %1121 = vmatpush.bf16.msra.mxu0 %v1046
          %1122 = vmatpush.bf16.msra.mxu0 %v1042
          %1123 = vmatpush.bf16.msra.mxu0 %v1038
          %1124 = vmatpush.bf16.msra.mxu0 %v1034
          %1125 = vmatpush.bf16.msra.mxu0 %v1030
          %1126 = vmatmul.bf16.gmra.mxu0 %v931
          %v1127 = vpop.f32.mrf.mxu0
          %v1128 = vadd.f32 0.0, %v1127
          %v1129 = vpop.f32.mrf.mxu0
          %1130 = vdwg.mxu0
          %1131 = vmatpush.bf16.msra.mxu0 %v1059
          %1132 = vmatpush.bf16.msra.mxu0 %v1055
          %1133 = vmatpush.bf16.msra.mxu0 %v1051
          %1134 = vmatpush.bf16.msra.mxu0 %v1047
          %1135 = vmatpush.bf16.msra.mxu0 %v1043
          %1136 = vmatpush.bf16.msra.mxu0 %v1039
          %1137 = vmatpush.bf16.msra.mxu0 %v1035
          %1138 = vmatpush.bf16.msra.mxu0 %v1031
          %1139 = vmatmul.bf16.gmra.mxu0 %v931
          %v1140 = vpop.f32.mrf.mxu0
          %v1141 = vadd.f32 0.0, %v1140
          %v1142 = vpop.f32.mrf.mxu0
          %1143 = vdwg.mxu0
          %v1144 = vadd.f32 %v924, %v1102
          %v1145 = vadd.f32 %v925, %v1115
          %v1146 = vadd.f32 %v926, %v1128
          %v1147 = vadd.f32 %v927, %v1141
          %v1148 = vxor.u32 %v1144, 2147483648
          %v1149 = vmul.f32 %v1148, 1.442695
          %v1150 = vpow.pop %v1149
          %v1151 = vadd.f32 %v1150, 1.0
          %v1152 = vrcp.pop %v1151
          %v1153 = vmul.f32 %v1151, %v1152
          %v1154 = vsub.f32 1.0, %v1153
          %v1155 = vmul.f32 %v1152, %v1154
          %v1156 = vadd.f32 %v1152, %v1155
          %vm1157 = vweird.f32 %v1151
          %vm1158 = vweird.f32 %v1152
          %vm1159 = vmor %vm1157, %vm1158
          %v1160 = vsel %vm1159, %v1152, %v1156
          %v1161 = vand.u32 2147483647, %v1151
          %vm1162 = vcmp.eq.f32.partialorder %v1161, 8.507059e+37
          %v1163 = vand.u32 %v1151, 2147483648
          %v1164 = vor.u32 1.1754944e-38, %v1163
          %v1165 = vsel %vm1162, %v1164, %v1160
          %v1166 = vmul.f32 1.0, %v1165
          %v1167 = vxor.u32 %v1145, 2147483648
          %v1168 = vmul.f32 %v1167, 1.442695
          %v1169 = vpow.pop %v1168
          %v1170 = vadd.f32 %v1169, 1.0
          %v1171 = vrcp.pop %v1170
          %v1172 = vmul.f32 %v1170, %v1171
          %v1173 = vsub.f32 1.0, %v1172
          %v1174 = vmul.f32 %v1171, %v1173
          %v1175 = vadd.f32 %v1171, %v1174
          %vm1176 = vweird.f32 %v1170
          %vm1177 = vweird.f32 %v1171
          %vm1178 = vmor %vm1176, %vm1177
          %v1179 = vsel %vm1178, %v1171, %v1175
          %v1180 = vand.u32 2147483647, %v1170
          %vm1181 = vcmp.eq.f32.partialorder %v1180, 8.507059e+37
          %v1182 = vand.u32 %v1170, 2147483648
          %v1183 = vor.u32 1.1754944e-38, %v1182
          %v1184 = vsel %vm1181, %v1183, %v1179
          %v1185 = vmul.f32 1.0, %v1184
          %v1186 = vtanh.pop %v1146
          %v1187 = vxor.u32 %v1147, 2147483648
          %v1188 = vmul.f32 %v1187, 1.442695
          %v1189 = vpow.pop %v1188
          %v1190 = vadd.f32 %v1189, 1.0
          %v1191 = vrcp.pop %v1190
          %v1192 = vmul.f32 %v1190, %v1191
          %v1193 = vsub.f32 1.0, %v1192
          %v1194 = vmul.f32 %v1191, %v1193
          %v1195 = vadd.f32 %v1191, %v1194
          %vm1196 = vweird.f32 %v1190
          %vm1197 = vweird.f32 %v1191
          %vm1198 = vmor %vm1196, %vm1197
          %v1199 = vsel %vm1198, %v1191, %v1195
          %v1200 = vand.u32 2147483647, %v1190
          %vm1201 = vcmp.eq.f32.partialorder %v1200, 8.507059e+37
          %v1202 = vand.u32 %v1190, 2147483648
          %v1203 = vor.u32 1.1754944e-38, %v1202
          %v1204 = vsel %vm1201, %v1203, %v1199
          %v1205 = vmul.f32 1.0, %v1204
          %v1206 = vld [vmem:[#allocation5] sm:$0xff]
          %v1207 = vmul.f32 %v1185, %v1206
          %v1208 = vmul.f32 %v1166, %v1186
          %v1209 = vadd.f32 %v1207, %v1208
          %v1210 = vtanh.pop %v1209
          %v1211 = vmul.f32 %v1205, %v1210
          %v1212 = vsel %vm929, 1, 0
          %1213 = vset.pattern.permute.xlu0 0
          %1214 = vperm.xlu0 %1213, %v1212
          %v1215 = vpop.permute.xlu0 %1214
          %vm1216 = vcmp.eq.s32.totalorder %v1215, 1
          %v1217 = vsel %vm1216, %v1211, %v930
          %1218 = vst [vmem:[#allocation4] sm:$0xff] %v1217
          %v1219 = vld [vmem:[#allocation5] sm:$0xff]
          %v1220 = vsel %vm1216, %v1209, %v1219
          %1221 = vst [vmem:[#allocation5] sm:$0xff] %v1220
          %s1222 = ssub.s32 %s907, 1
          %s1223 = ssub.s32 %s1222, %s913
          %s1224 = smul.u32 %s1223, 8
          %s1225 = sshra.s32 %s1224, 3
          %s1226 = sand.u32 %s1224, 7
          %s1227 = smul.u32 %s1225, 4
          %s1228 = smul.addr %s1227, 8
          %s1229 = scalar_lea.vmem [#allocation3], %s1228
          %v1230 = vld [vmem:[%s1229] sm:$0xff]
          %v1231 = vld [vmem:[%s1229 + $0x8] sm:$0xff]
          %v1232 = vld [vmem:[%s1229 + $0x10] sm:$0xff]
          %v1233 = vld [vmem:[%s1229 + $0x18] sm:$0xff]
          %v1234 = vstv %s1223
          %vm1235 = vcmp.lt.s32.totalorder %v1234, %v906
          %v1236 = vld [vmem:[#allocation6] sm:$0xff]
          %v1237 = vpack.c.bf16 %v1236, %v1236
          %v1270 = vunpack.c.l.b16 %v874
          %v1271 = vunpack.c.h.b16 %v874
          %v1272 = vunpack.c.l.b16 %v875
          %v1273 = vunpack.c.h.b16 %v875
          %v1274 = vunpack.c.l.b16 %v876
          %v1275 = vunpack.c.h.b16 %v876
          %v1276 = vunpack.c.l.b16 %v877
          %v1277 = vunpack.c.h.b16 %v877
          %v1278 = vunpack.c.l.b16 %v878
          %v1279 = vunpack.c.h.b16 %v878
          %v1280 = vunpack.c.l.b16 %v879
          %v1281 = vunpack.c.h.b16 %v879
          %v1282 = vunpack.c.l.b16 %v880
          %v1283 = vunpack.c.h.b16 %v880
          %v1284 = vunpack.c.l.b16 %v881
          %v1285 = vunpack.c.h.b16 %v881
          %v1286 = vunpack.c.l.b16 %v882
          %v1287 = vunpack.c.h.b16 %v882
          %v1288 = vunpack.c.l.b16 %v883
          %v1289 = vunpack.c.h.b16 %v883
          %v1290 = vunpack.c.l.b16 %v884
          %v1291 = vunpack.c.h.b16 %v884
          %v1292 = vunpack.c.l.b16 %v885
          %v1293 = vunpack.c.h.b16 %v885
          %v1294 = vunpack.c.l.b16 %v886
          %v1295 = vunpack.c.h.b16 %v886
          %v1296 = vunpack.c.l.b16 %v887
          %v1297 = vunpack.c.h.b16 %v887
          %v1298 = vunpack.c.l.b16 %v888
          %v1299 = vunpack.c.h.b16 %v888
          %v1300 = vunpack.c.l.b16 %v889
          %v1301 = vunpack.c.h.b16 %v889
          %v1302 = vunpack.c.l.b16 %v890
          %v1303 = vunpack.c.h.b16 %v890
          %v1304 = vunpack.c.l.b16 %v891
          %v1305 = vunpack.c.h.b16 %v891
          %v1306 = vunpack.c.l.b16 %v892
          %v1307 = vunpack.c.h.b16 %v892
          %v1308 = vunpack.c.l.b16 %v893
          %v1309 = vunpack.c.h.b16 %v893
          %v1310 = vunpack.c.l.b16 %v894
          %v1311 = vunpack.c.h.b16 %v894
          %v1312 = vunpack.c.l.b16 %v895
          %v1313 = vunpack.c.h.b16 %v895
          %v1314 = vunpack.c.l.b16 %v896
          %v1315 = vunpack.c.h.b16 %v896
          %v1316 = vunpack.c.l.b16 %v897
          %v1317 = vunpack.c.h.b16 %v897
          %v1318 = vunpack.c.l.b16 %v898
          %v1319 = vunpack.c.h.b16 %v898
          %v1320 = vunpack.c.l.b16 %v899
          %v1321 = vunpack.c.h.b16 %v899
          %v1322 = vunpack.c.l.b16 %v900
          %v1323 = vunpack.c.h.b16 %v900
          %v1324 = vunpack.c.l.b16 %v901
          %v1325 = vunpack.c.h.b16 %v901
          %v1326 = vunpack.c.l.b16 %v902
          %v1327 = vunpack.c.h.b16 %v902
          %v1328 = vunpack.c.l.b16 %v903
          %v1329 = vunpack.c.h.b16 %v903
          %v1330 = vunpack.c.l.b16 %v904
          %v1331 = vunpack.c.h.b16 %v904
          %v1332 = vunpack.c.l.b16 %v905
          %v1333 = vunpack.c.h.b16 %v905
          %v1334 = vpack.c.b16 %v1274, %v1270
          %v1335 = vpack.c.b16 %v1275, %v1271
          %v1336 = vpack.c.b16 %v1276, %v1272
          %v1337 = vpack.c.b16 %v1277, %v1273
          %v1338 = vpack.c.b16 %v1282, %v1278
          %v1339 = vpack.c.b16 %v1283, %v1279
          %v1340 = vpack.c.b16 %v1284, %v1280
          %v1341 = vpack.c.b16 %v1285, %v1281
          %v1342 = vpack.c.b16 %v1290, %v1286
          %v1343 = vpack.c.b16 %v1291, %v1287
          %v1344 = vpack.c.b16 %v1292, %v1288
          %v1345 = vpack.c.b16 %v1293, %v1289
          %v1346 = vpack.c.b16 %v1298, %v1294
          %v1347 = vpack.c.b16 %v1299, %v1295
          %v1348 = vpack.c.b16 %v1300, %v1296
          %v1349 = vpack.c.b16 %v1301, %v1297
          %v1350 = vpack.c.b16 %v1306, %v1302
          %v1351 = vpack.c.b16 %v1307, %v1303
          %v1352 = vpack.c.b16 %v1308, %v1304
          %v1353 = vpack.c.b16 %v1309, %v1305
          %v1354 = vpack.c.b16 %v1314, %v1310
          %v1355 = vpack.c.b16 %v1315, %v1311
          %v1356 = vpack.c.b16 %v1316, %v1312
          %v1357 = vpack.c.b16 %v1317, %v1313
          %v1358 = vpack.c.b16 %v1322, %v1318
          %v1359 = vpack.c.b16 %v1323, %v1319
          %v1360 = vpack.c.b16 %v1324, %v1320
          %v1361 = vpack.c.b16 %v1325, %v1321
          %v1362 = vpack.c.b16 %v1330, %v1326
          %v1363 = vpack.c.b16 %v1331, %v1327
          %v1364 = vpack.c.b16 %v1332, %v1328
          %v1365 = vpack.c.b16 %v1333, %v1329
          %1398 = vmatpush.bf16.msra.mxu0 %v1362
          %1399 = vmatpush.bf16.msra.mxu0 %v1358
          %1400 = vmatpush.bf16.msra.mxu0 %v1354
          %1401 = vmatpush.bf16.msra.mxu0 %v1350
          %1402 = vmatpush.bf16.msra.mxu0 %v1346
          %1403 = vmatpush.bf16.msra.mxu0 %v1342
          %1404 = vmatpush.bf16.msra.mxu0 %v1338
          %1405 = vmatpush.bf16.msra.mxu0 %v1334
          %1406 = vmatmul.bf16.gmra.mxu0 %v1237
          %v1407 = vpop.f32.mrf.mxu0
          %v1408 = vadd.f32 0.0, %v1407
          %v1409 = vpop.f32.mrf.mxu0
          %1410 = vdwg.mxu0
          %1411 = vmatpush.bf16.msra.mxu0 %v1363
          %1412 = vmatpush.bf16.msra.mxu0 %v1359
          %1413 = vmatpush.bf16.msra.mxu0 %v1355
          %1414 = vmatpush.bf16.msra.mxu0 %v1351
          %1415 = vmatpush.bf16.msra.mxu0 %v1347
          %1416 = vmatpush.bf16.msra.mxu0 %v1343
          %1417 = vmatpush.bf16.msra.mxu0 %v1339
          %1418 = vmatpush.bf16.msra.mxu0 %v1335
          %1419 = vmatmul.bf16.gmra.mxu0 %v1237
          %v1420 = vpop.f32.mrf.mxu0
          %v1421 = vadd.f32 0.0, %v1420
          %v1422 = vpop.f32.mrf.mxu0
          %1423 = vdwg.mxu0
          %1424 = vmatpush.bf16.msra.mxu0 %v1364
          %1425 = vmatpush.bf16.msra.mxu0 %v1360
          %1426 = vmatpush.bf16.msra.mxu0 %v1356
          %1427 = vmatpush.bf16.msra.mxu0 %v1352
          %1428 = vmatpush.bf16.msra.mxu0 %v1348
          %1429 = vmatpush.bf16.msra.mxu0 %v1344
          %1430 = vmatpush.bf16.msra.mxu0 %v1340
          %1431 = vmatpush.bf16.msra.mxu0 %v1336
          %1432 = vmatmul.bf16.gmra.mxu0 %v1237
          %v1433 = vpop.f32.mrf.mxu0
          %v1434 = vadd.f32 0.0, %v1433
          %v1435 = vpop.f32.mrf.mxu0
          %1436 = vdwg.mxu0
          %1437 = vmatpush.bf16.msra.mxu0 %v1365
          %1438 = vmatpush.bf16.msra.mxu0 %v1361
          %1439 = vmatpush.bf16.msra.mxu0 %v1357
          %1440 = vmatpush.bf16.msra.mxu0 %v1353
          %1441 = vmatpush.bf16.msra.mxu0 %v1349
          %1442 = vmatpush.bf16.msra.mxu0 %v1345
          %1443 = vmatpush.bf16.msra.mxu0 %v1341
          %1444 = vmatpush.bf16.msra.mxu0 %v1337
          %1445 = vmatmul.bf16.gmra.mxu0 %v1237
          %v1446 = vpop.f32.mrf.mxu0
          %v1447 = vadd.f32 0.0, %v1446
          %v1448 = vpop.f32.mrf.mxu0
          %1449 = vdwg.mxu0
          %v1450 = vadd.f32 %v1230, %v1408
          %v1451 = vadd.f32 %v1231, %v1421
          %v1452 = vadd.f32 %v1232, %v1434
          %v1453 = vadd.f32 %v1233, %v1447
          %v1454 = vxor.u32 %v1450, 2147483648
          %v1455 = vmul.f32 %v1454, 1.442695
          %v1456 = vpow.pop %v1455
          %v1457 = vadd.f32 %v1456, 1.0
          %v1458 = vrcp.pop %v1457
          %v1459 = vmul.f32 %v1457, %v1458
          %v1460 = vsub.f32 1.0, %v1459
          %v1461 = vmul.f32 %v1458, %v1460
          %v1462 = vadd.f32 %v1458, %v1461
          %vm1463 = vweird.f32 %v1457
          %vm1464 = vweird.f32 %v1458
          %vm1465 = vmor %vm1463, %vm1464
          %v1466 = vsel %vm1465, %v1458, %v1462
          %v1467 = vand.u32 2147483647, %v1457
          %vm1468 = vcmp.eq.f32.partialorder %v1467, 8.507059e+37
          %v1469 = vand.u32 %v1457, 2147483648
          %v1470 = vor.u32 1.1754944e-38, %v1469
          %v1471 = vsel %vm1468, %v1470, %v1466
          %v1472 = vmul.f32 1.0, %v1471
          %v1473 = vxor.u32 %v1451, 2147483648
          %v1474 = vmul.f32 %v1473, 1.442695
          %v1475 = vpow.pop %v1474
          %v1476 = vadd.f32 %v1475, 1.0
          %v1477 = vrcp.pop %v1476
          %v1478 = vmul.f32 %v1476, %v1477
          %v1479 = vsub.f32 1.0, %v1478
          %v1480 = vmul.f32 %v1477, %v1479
          %v1481 = vadd.f32 %v1477, %v1480
          %vm1482 = vweird.f32 %v1476
          %vm1483 = vweird.f32 %v1477
          %vm1484 = vmor %vm1482, %vm1483
          %v1485 = vsel %vm1484, %v1477, %v1481
          %v1486 = vand.u32 2147483647, %v1476
          %vm1487 = vcmp.eq.f32.partialorder %v1486, 8.507059e+37
          %v1488 = vand.u32 %v1476, 2147483648
          %v1489 = vor.u32 1.1754944e-38, %v1488
          %v1490 = vsel %vm1487, %v1489, %v1485
          %v1491 = vmul.f32 1.0, %v1490
          %v1492 = vtanh.pop %v1452
          %v1493 = vxor.u32 %v1453, 2147483648
          %v1494 = vmul.f32 %v1493, 1.442695
          %v1495 = vpow.pop %v1494
          %v1496 = vadd.f32 %v1495, 1.0
          %v1497 = vrcp.pop %v1496
          %v1498 = vmul.f32 %v1496, %v1497
          %v1499 = vsub.f32 1.0, %v1498
          %v1500 = vmul.f32 %v1497, %v1499
          %v1501 = vadd.f32 %v1497, %v1500
          %vm1502 = vweird.f32 %v1496
          %vm1503 = vweird.f32 %v1497
          %vm1504 = vmor %vm1502, %vm1503
          %v1505 = vsel %vm1504, %v1497, %v1501
          %v1506 = vand.u32 2147483647, %v1496
          %vm1507 = vcmp.eq.f32.partialorder %v1506, 8.507059e+37
          %v1508 = vand.u32 %v1496, 2147483648
          %v1509 = vor.u32 1.1754944e-38, %v1508
          %v1510 = vsel %vm1507, %v1509, %v1505
          %v1511 = vmul.f32 1.0, %v1510
          %v1512 = vld [vmem:[#allocation7] sm:$0xff]
          %v1513 = vmul.f32 %v1491, %v1512
          %v1514 = vmul.f32 %v1472, %v1492
          %v1515 = vadd.f32 %v1513, %v1514
          %v1516 = vtanh.pop %v1515
          %v1517 = vmul.f32 %v1511, %v1516
          %v1518 = vsel %vm1235, 1, 0
          %1519 = vset.pattern.permute.xlu0 0
          %1520 = vperm.xlu0 %1519, %v1518
          %v1521 = vpop.permute.xlu0 %1520
          %vm1522 = vcmp.eq.s32.totalorder %v1521, 1
          %v1523 = vsel %vm1522, %v1517, %v1236
          %1524 = vst [vmem:[#allocation6] sm:$0xff] %v1523
          %v1525 = vld [vmem:[#allocation7] sm:$0xff]
          %v1526 = vsel %vm1522, %v1515, %v1525
          %1527 = vst [vmem:[#allocation7] sm:$0xff] %v1526
        $region69: #{tpu_custom_call.1} parent=55 // loop_footer
          %s915 = sadd.s32 %s913, 1
        $region70: #{tpu_custom_call.1} parent=55 // loop_footer_branch
          %912 = sbr.rel target = $region66
        $region71: #{tpu_custom_call.1} parent=55 // loop_exit
          _
        %v1528 = vld [vmem:[#allocation4] sm:$0xff]
        %v1529 = vld [vmem:[%s7] sm:$0x1]
        %v1531 = vperm.slane %v1529, 0
        %v1533 = vmul.f32 %v1528, %v1531
        %1534 = vadd.xlane.f32.xlu0 %v1533
        %v1535 = vpop.xlane.xlu0 %1534
        %v1536 = vld [vmem:[#allocation6] sm:$0xff]
        %v1537 = vld [vmem:[%s8] sm:$0x1]
        %v1539 = vperm.slane %v1537, 0
        %v1541 = vmul.f32 %v1536, %v1539
        %1542 = vadd.xlane.f32.xlu0 %v1541
        %v1543 = vpop.xlane.xlu0 %1542
        %v1544 = vadd.f32 %v1535, %v1543
        %v1545 = vld [vmem:[#allocation10] sm:$0x1]
        %v1547 = vperm.slane %v1545, 0
        %v1549 = vadd.f32 %v1544, %v1547
        %v1550 = vxor.u32 %v1549, 2147483648
        %v1551 = vmul.f32 %v1550, 1.442695
        %v1552 = vpow.pop %v1551
        %v1553 = vadd.f32 %v1552, 1.0
        %v1554 = vrcp.pop %v1553
        %v1555 = vmul.f32 %v1553, %v1554
        %v1556 = vsub.f32 1.0, %v1555
        %v1557 = vmul.f32 %v1554, %v1556
        %v1558 = vadd.f32 %v1554, %v1557
        %vm1559 = vweird.f32 %v1553
        %vm1560 = vweird.f32 %v1554
        %vm1561 = vmor %vm1559, %vm1560
        %v1562 = vsel %vm1561, %v1554, %v1558
        %v1563 = vand.u32 2147483647, %v1553
        %vm1564 = vcmp.eq.f32.partialorder %v1563, 8.507059e+37
        %v1565 = vand.u32 %v1553, 2147483648
        %v1566 = vor.u32 1.1754944e-38, %v1565
        %v1567 = vsel %vm1564, %v1566, %v1562
        %v1568 = vmul.f32 1.0, %v1567
        %vm1569 = vcmask 7168
        %1570 = vst.msk [vmem:[%s385] sm:$0xff] %vm1569, %v1568
        %p1571 = scmp.lt.s32.totalorder %s26, 1
        %s1572 = scalar_select %p1571, %s26, 1
        %s1573 = smul.addr %s1572, 8
        %s1574 = scalar_lea.vmem %s10, %s1573
        // Predicated region
        $region72: #{tpu_custom_call.1} parent=55 // pred_check
          %p1575 = pneg %p243
        $region73: #{tpu_custom_call.1} parent=55 // pred_check_branch
          %1577 = sbr.rel (%p1575) target = $region75
        $region74: #{tpu_custom_call.1} parent=55 // pred_region
          _
        $region75: #{tpu_custom_call.1} parent=55 // pred_fallthru
          _
      $region56: #{tpu_custom_call.1} parent=5 // pred_fallthru
        _
      %p1578 = scmp.le.s32.totalorder 2, %s21
      // Predicated region
      $region76: #{tpu_custom_call.1} parent=5 // pred_check
        %p1579 = pneg %p1578
      $region77: #{tpu_custom_call.1} parent=5 // pred_check_branch
        %1581 = sbr.rel (%p1579) target = $region79
      $region78: #{tpu_custom_call.1} parent=5 // pred_region
        %s1582 = ssub.s32 %s21, 2
        // Predicated region
        $region80: #{tpu_custom_call.1} parent=78 // pred_check
          %p1583 = pneg %p249
        $region81: #{tpu_custom_call.1} parent=78 // pred_check_branch
          %1585 = sbr.rel (%p1583) target = $region83
        $region82: #{tpu_custom_call.1} parent=78 // pred_region
          %p1586 = scmp.lt.s32.totalorder %s27, 1
          %s1587 = scalar_select %p1586, %s27, 1
          %s1588 = smul.addr %s1587, 8
          %s1589 = scalar_lea.vmem %s10, %s1588
        $region83: #{tpu_custom_call.1} parent=78 // pred_fallthru
          _
      $region79: #{tpu_custom_call.1} parent=5 // pred_fallthru
        _
    $region6: #{tpu_custom_call.1} parent=1 // loop_footer
      %s25 = sadd.s32 1, %s21
    $region7: #{tpu_custom_call.1} parent=1 // loop_footer_branch
      %20 = sbr.rel target = $region3
    $region8: #{tpu_custom_call.1} parent=1 // loop_exit
      _
    %1590 = vsyncpa [#allocation12], 1
    %s1591 = scalar_lea.sflag [#allocation12], 1
    %1592 = vsyncpa %s1591, 1
    %1593 = vsyncpa [#allocation14], 1

</llo_original>
